<compile_context>
chip_gen: v6e
topology: v6e:2x2x1
jax: 0.10.0
libtpu: 0.0.40
codegen_flags: <defaults>
</compile_context>

<pallas_src>
import jax
import jax.numpy as jnp
from jax import lax
from jax.experimental import pallas as pl
from jax.experimental.pallas import tpu as pltpu

# contract last dim of lhs with last dim of rhs  ==  x @ W^T  (nn.Linear layout)
_DN_LAST_LAST = (((1,), (1,)), ((), ()))


def channel_mix_kernel(x_ref, s_ref, tmk_ref, tmr_ref,
                       wk_ref, wr_ref, wv_ref,
                       rkv_ref,
                       xk_sc, r_sc, acc_sc):
    j = pl.program_id(1)               # ffn (reduction) tile index -- innermost axis
    nj = pl.num_programs(1)

    @pl.when(j == 0)
    def _init():
        x = x_ref[...]                                 # [TM, E] f32
        s = s_ref[...]                                 # [TM, E] f32
        d = x - s
        xk = s + d * tmk_ref[...]                      # token/state mixing (VPU)
        xr = s + d * tmr_ref[...]
        xk_sc[...] = xk.astype(xk_sc.dtype)            # bf16 MXU lhs, reused per F-tile

        # receptance branch: r = hardsigmoid(xr @ W_r^T), computed once per token tile
        r = lax.dot_general(xr.astype(jnp.bfloat16), wr_ref[...],
                            _DN_LAST_LAST, preferred_element_type=jnp.float32)
        r_sc[...] = jnp.clip((r + 3.0) * (1.0 / 6.0), 0.0, 1.0)

        acc_sc[...] = jnp.zeros_like(acc_sc)           # kv accumulator

    # key/value branch, fused per F-tile:
    #   k_tile  = relu(xk @ W_k_tile^T)^2              [TM, TF]
    #   kv     += k_tile @ W_v_tile^T                  [TM, E]
    k = lax.dot_general(xk_sc[...], wk_ref[...],
                        _DN_LAST_LAST, preferred_element_type=jnp.float32)
    k = jnp.square(jnp.maximum(k, 0.0))
    acc_sc[...] += lax.dot_general(k.astype(jnp.bfloat16), wv_ref[...],
                                   _DN_LAST_LAST, preferred_element_type=jnp.float32)

    @pl.when(j == nj - 1)
    def _finalize():
        rkv_ref[...] = (r_sc[...] * acc_sc[...]).astype(rkv_ref.dtype)


def _pad_rows(a, rows):
    return a if a.shape[0] == rows else jnp.pad(a, ((0, rows - a.shape[0]), (0, 0)))


def rwkv_channel_mix(x, state_ffn, time_mix_k, time_mix_r,
                     w_key, w_recept, w_value, *, tm=256, tf=512):
    """
    x, state_ffn : [T, E] float32
    time_mix_k/r : [1, E]
    w_key        : [F, E]   (nn.Linear(n_embed, ffn_dim).weight, [out, in])
    w_recept     : [E, E]
    w_value      : [E, F]
    returns (rkv [T, E], new_ffn = x)
    """
    T, E = x.shape
    F = w_key.shape[0]
    out_dtype = x.dtype

    # Keep [out, in] layout (no transposes). Cast weights to bf16 once for the MXU
    # (ideally the caller already stores them in bf16 so this is a no-op).
    wk = w_key.astype(jnp.bfloat16)      # [F, E]
    wr = w_recept.astype(jnp.bfloat16)   # [E, E]
    wv = w_value.astype(jnp.bfloat16)    # [E, F]

    tmk = time_mix_k.reshape(1, E).astype(jnp.float32)
    tmr = time_mix_r.reshape(1, E).astype(jnp.float32)

    # --- tiling ---------------------------------------------------------------
    tm_eff = min(tm, T)
    t_pad = pl.cdiv(T, tm_eff) * tm_eff
    xp = _pad_rows(x, t_pad)
    sp = _pad_rows(state_ffn, t_pad)

    # TF must evenly divide F and (when < F) be a multiple of 128 (lane dim of W_v block)
    tf_eff = tf if (F > tf and F % tf == 0) else F
    grid = (t_pad // tm_eff, F // tf_eff)

    # --- scheduling hints -------------------------------------------------------
    flops = 2 * T * (E * E + 2 * E * F)
    bytes_accessed = (2 * (E * E + 2 * E * F)   # bf16 weights
                      + 4 * T * E * 3           # x, state in; rkv out (f32)
                      + 4 * 2 * E)              # time-mix vectors
    cost = pl.CostEstimate(flops=flops, transcendentals=0,
                           bytes_accessed=bytes_accessed)

    # Rough VMEM footprint; raise the scoped limit only when actually needed.
    vmem_est = (2 * 2 * E * (E + 2 * tf_eff)    # double-buffered bf16 weight blocks
                + 2 * 2 * tm_eff * E * 4        # x + state tiles, double-buffered f32
                + 2 * tm_eff * E * 4            # rkv output tile
                + tm_eff * E * (2 + 4 + 4))     # xk / r / acc scratch
    vmem_limit = None
    if vmem_est > 32 * 1024 * 1024:
        # cap at 64 MiB so the same kernel still fits v7x's per-TC VMEM
        vmem_limit = min(int(vmem_est * 1.25), 64 * 1024 * 1024)

    rkv_pad = pl.pallas_call(
        channel_mix_kernel,
        out_shape=jax.ShapeDtypeStruct((t_pad, E), out_dtype),
        grid_spec=pltpu.PrefetchScalarGridSpec(
            num_scalar_prefetch=0,
            grid=grid,
            in_specs=[
                pl.BlockSpec((tm_eff, E), lambda i, j: (i, 0)),   # x
                pl.BlockSpec((tm_eff, E), lambda i, j: (i, 0)),   # state_ffn
                pl.BlockSpec((1, E),      lambda i, j: (0, 0)),   # time_mix_k
                pl.BlockSpec((1, E),      lambda i, j: (0, 0)),   # time_mix_r
                pl.BlockSpec((tf_eff, E), lambda i, j: (j, 0)),   # W_key    [F, E]
                pl.BlockSpec((E, E),      lambda i, j: (0, 0)),   # W_recept [E, E]
                pl.BlockSpec((E, tf_eff), lambda i, j: (0, j)),   # W_value  [E, F]
            ],
            out_specs=pl.BlockSpec((tm_eff, E), lambda i, j: (i, 0)),
            scratch_shapes=[
                pltpu.VMEM((tm_eff, E), jnp.bfloat16),   # xk (bf16 MXU lhs)
                pltpu.VMEM((tm_eff, E), jnp.float32),    # r
                pltpu.VMEM((tm_eff, E), jnp.float32),    # kv accumulator
            ]),
        compiler_params=pltpu.CompilerParams(
            dimension_semantics=("parallel", "arbitrary"),
            vmem_limit_bytes=vmem_limit),
        cost_estimate=cost,
    )(xp, sp, tmk, tmr, wk, wr, wv)

    rkv = rkv_pad[:T] if t_pad != T else rkv_pad
    # new_ffn = x: pure passthrough, returned from the wrapper (no HBM writeback).
    return rkv, x


def _reference(x, state_ffn, tmk, tmr, w_key, w_recept, w_value):
    # mirrors the kernel numerics (bf16 matmul operands, f32 accumulation)
    xk = state_ffn + (x - state_ffn) * tmk
    xr = state_ffn + (x - state_ffn) * tmr
    wkb = w_key.astype(jnp.bfloat16)
    wrb = w_recept.astype(jnp.bfloat16)
    wvb = w_value.astype(jnp.bfloat16)
    r = lax.dot_general(xr.astype(jnp.bfloat16), wrb, _DN_LAST_LAST,
                        preferred_element_type=jnp.float32)
    r = jnp.clip((r + 3.0) / 6.0, 0.0, 1.0)
    k = lax.dot_general(xk.astype(jnp.bfloat16), wkb, _DN_LAST_LAST,
                        preferred_element_type=jnp.float32)
    k = jnp.square(jnp.maximum(k, 0.0))
    kv = lax.dot_general(k.astype(jnp.bfloat16), wvb, _DN_LAST_LAST,
                         preferred_element_type=jnp.float32)
    return r * kv, x


if __name__ == "__main__":
    T = 200          # tokens (non-multiple of the tile -> exercises padding path)
    n_embed = 256    # multiple of 128 -> lane-dense outputs
    ffn_dim = 1024   # RWKV convention: 4 * n_embed

    key = jax.random.PRNGKey(0)
    kx, ks, kk, kr, kv = jax.random.split(key, 5)

    x = jax.random.normal(kx, (T, n_embed), dtype=jnp.float32)
    state_ffn = jax.random.normal(ks, (T, n_embed), dtype=jnp.float32)

    # __init__ sets time_mix_* to ones; perturb deterministically so the mixing
    # path is actually exercised.
    time_mix_k = jnp.full((1, n_embed), 0.75, dtype=jnp.float32)
    time_mix_r = jnp.full((1, n_embed), 0.25, dtype=jnp.float32)

    # nn.Linear convention: weight shape = [out_features, in_features]
    w_key = jax.random.normal(kk, (ffn_dim, n_embed), dtype=jnp.float32) * 0.1
    w_recept = jax.random.normal(kr, (n_embed, n_embed), dtype=jnp.float32) * 0.1
    w_value = jax.random.normal(kv, (n_embed, ffn_dim), dtype=jnp.float32) * 0.1

    rkv, new_ffn = rwkv_channel_mix(x, state_ffn, time_mix_k, time_mix_r,
                                    w_key, w_recept, w_value,
                                    tm=128, tf=512)   # grid = (2, 2)
    jax.block_until_ready((rkv, new_ffn))

    rkv_ref, ffn_ref = _reference(x, state_ffn, time_mix_k, time_mix_r,
                                  w_key, w_recept, w_value)
    assert rkv.shape == (T, n_embed)
    assert jnp.allclose(rkv, rkv_ref, rtol=1e-2, atol=1e-2), "rkv mismatch"
    assert new_ffn is x or jnp.array_equal(new_ffn, ffn_ref), "new_ffn mismatch"

    print("KERNEL_OK")
</pallas_src>

<mosaic_0001>
module attributes {stable_mosaic.version = 11 : i64} {
  func.func @channel_mix_kernel(%arg0: i32, %arg1: i32, %arg2: memref<128x256xf32, #tpu.memory_space<vmem>>, %arg3: memref<128x256xf32, #tpu.memory_space<vmem>>, %arg4: memref<1x256xf32, #tpu.memory_space<vmem>>, %arg5: memref<1x256xf32, #tpu.memory_space<vmem>>, %arg6: memref<512x256xbf16, #tpu.memory_space<vmem>>, %arg7: memref<256x256xbf16, #tpu.memory_space<vmem>>, %arg8: memref<256x512xbf16, #tpu.memory_space<vmem>>, %arg9: memref<128x256xf32, #tpu.memory_space<vmem>>, %arg10: memref<128x256xbf16, #tpu.memory_space<vmem>>, %arg11: memref<128x256xf32, #tpu.memory_space<vmem>>, %arg12: memref<128x256xf32, #tpu.memory_space<vmem>>) attributes {dimension_semantics = [#tpu.dimension_semantics<parallel>, #tpu.dimension_semantics<arbitrary>], iteration_bounds = array<i64: 2, 2>, scalar_prefetch = 0 : i64, scratch_operands = 3 : i64, tpu.core_type = #tpu.core_type<tc>, window_params = [{transform_indices = @transform_0, window_bounds = array<i64: 128, 256>}, {transform_indices = @transform_1, window_bounds = array<i64: 128, 256>}, {pipeline_mode = #tpu.pipeline_mode<synchronous>, transform_indices = @transform_2, window_bounds = array<i64: 1, 256>}, {pipeline_mode = #tpu.pipeline_mode<synchronous>, transform_indices = @transform_3, window_bounds = array<i64: 1, 256>}, {transform_indices = @transform_4, window_bounds = array<i64: 512, 256>}, {pipeline_mode = #tpu.pipeline_mode<synchronous>, transform_indices = @transform_5, window_bounds = array<i64: 256, 256>}, {transform_indices = @transform_6, window_bounds = array<i64: 256, 512>}, {transform_indices = @transform_7, window_bounds = array<i64: 128, 256>}]} {
    %c0_i32 = arith.constant 0 : i32
    %0 = arith.cmpi eq, %arg1, %c0_i32 : i32
    %1 = arith.extui %0 : i1 to i32
    %c0_i32_0 = arith.constant 0 : i32
    %2 = arith.cmpi ne, %1, %c0_i32_0 : i32
    scf.if %2 {
      %c0_13 = arith.constant 0 : index
      %c0_14 = arith.constant 0 : index
      %18 = vector.load %arg2[%c0_13, %c0_14] : memref<128x256xf32, #tpu.memory_space<vmem>>, vector<128x256xf32>
      %c0_15 = arith.constant 0 : index
      %c0_16 = arith.constant 0 : index
      %19 = vector.load %arg3[%c0_15, %c0_16] : memref<128x256xf32, #tpu.memory_space<vmem>>, vector<128x256xf32>
      %20 = arith.subf %18, %19 : vector<128x256xf32>
      %c0_17 = arith.constant 0 : index
      %c0_18 = arith.constant 0 : index
      %21 = vector.load %arg4[%c0_17, %c0_18] : memref<1x256xf32, #tpu.memory_space<vmem>>, vector<1x256xf32>
      %22 = vector.broadcast %21 : vector<1x256xf32> to vector<128x256xf32>
      %23 = arith.mulf %20, %22 : vector<128x256xf32>
      %24 = arith.addf %19, %23 : vector<128x256xf32>
      %c0_19 = arith.constant 0 : index
      %c0_20 = arith.constant 0 : index
      %25 = vector.load %arg5[%c0_19, %c0_20] : memref<1x256xf32, #tpu.memory_space<vmem>>, vector<1x256xf32>
      %26 = vector.broadcast %25 : vector<1x256xf32> to vector<128x256xf32>
      %27 = arith.mulf %20, %26 : vector<128x256xf32>
      %28 = arith.addf %19, %27 : vector<128x256xf32>
      %29 = arith.truncf %24 : vector<128x256xf32> to vector<128x256xbf16>
      %c0_21 = arith.constant 0 : index
      %c0_22 = arith.constant 0 : index
      %30 = vector.load %arg10[%c0_21, %c0_22] : memref<128x256xbf16, #tpu.memory_space<vmem>>, vector<128x256xbf16>
      tpu.vector_store %arg10[%c0_21, %c0_22], %29 {strides = array<i32>} : memref<128x256xbf16, #tpu.memory_space<vmem>>, vector<128x256xbf16>,
      %31 = arith.truncf %28 : vector<128x256xf32> to vector<128x256xbf16>
      %c0_23 = arith.constant 0 : index
      %c0_24 = arith.constant 0 : index
      %32 = vector.load %arg7[%c0_23, %c0_24] : memref<256x256xbf16, #tpu.memory_space<vmem>>, vector<256x256xbf16>
      %cst_25 = arith.constant dense<0.000000e+00> : vector<128x256xf32>
      %33 = tpu.matmul %31, %32, %cst_25 {dimension_numbers = #tpu.dot_dimension_numbers<[1], [1], [0], [0], [0, 0, 1, 0], [], []>} : vector<128x256xbf16>, vector<256x256xbf16>, vector<128x256xf32> -> vector<128x256xf32>
      %cst_26 = arith.constant 3.000000e+00 : f32
      %34 = vector.broadcast %cst_26 : f32 to vector<128x256xf32>
      %35 = arith.addf %33, %34 : vector<128x256xf32>
      %cst_27 = arith.constant 0.166666672 : f32
      %36 = vector.broadcast %cst_27 : f32 to vector<128x256xf32>
      %37 = arith.mulf %35, %36 : vector<128x256xf32>
      %cst_28 = arith.constant 0.000000e+00 : f32
      %cst_29 = arith.constant 1.000000e+00 : f32
      %38 = vector.broadcast %cst_28 : f32 to vector<128x256xf32>
      %39 = arith.maximumf %38, %37 : vector<128x256xf32>
      %40 = vector.broadcast %cst_29 : f32 to vector<128x256xf32>
      %41 = arith.minimumf %40, %39 : vector<128x256xf32>
      %c0_30 = arith.constant 0 : index
      %c0_31 = arith.constant 0 : index
      %42 = vector.load %arg11[%c0_30, %c0_31] : memref<128x256xf32, #tpu.memory_space<vmem>>, vector<128x256xf32>
      tpu.vector_store %arg11[%c0_30, %c0_31], %41 {strides = array<i32>} : memref<128x256xf32, #tpu.memory_space<vmem>>, vector<128x256xf32>,
      %cst_32 = arith.constant 0.000000e+00 : f32
      %43 = vector.broadcast %cst_32 : f32 to vector<128x256xf32>
      %c0_33 = arith.constant 0 : index
      %c0_34 = arith.constant 0 : index
      %44 = vector.load %arg12[%c0_33, %c0_34] : memref<128x256xf32, #tpu.memory_space<vmem>>, vector<128x256xf32>
      tpu.vector_store %arg12[%c0_33, %c0_34], %43 {strides = array<i32>} : memref<128x256xf32, #tpu.memory_space<vmem>>, vector<128x256xf32>,
    } else {
    }
    %c0 = arith.constant 0 : index
    %c0_1 = arith.constant 0 : index
    %3 = vector.load %arg10[%c0, %c0_1] : memref<128x256xbf16, #tpu.memory_space<vmem>>, vector<128x256xbf16>
    %c0_2 = arith.constant 0 : index
    %c0_3 = arith.constant 0 : index
    %4 = vector.load %arg6[%c0_2, %c0_3] : memref<512x256xbf16, #tpu.memory_space<vmem>>, vector<512x256xbf16>
    %cst = arith.constant dense<0.000000e+00> : vector<128x512xf32>
    %5 = tpu.matmul %3, %4, %cst {dimension_numbers = #tpu.dot_dimension_numbers<[1], [1], [0], [0], [0, 0, 1, 0], [], []>} : vector<128x256xbf16>, vector<512x256xbf16>, vector<128x512xf32> -> vector<128x512xf32>
    %cst_4 = arith.constant 0.000000e+00 : f32
    %6 = vector.broadcast %cst_4 : f32 to vector<128x512xf32>
    %7 = arith.maximumf %5, %6 : vector<128x512xf32>
    %8 = arith.mulf %7, %7 : vector<128x512xf32>
    %c0_5 = arith.constant 0 : index
    %c0_6 = arith.constant 0 : index
    %9 = vector.load %arg12[%c0_5, %c0_6] : memref<128x256xf32, #tpu.memory_space<vmem>>, vector<128x256xf32>
    %10 = arith.truncf %8 : vector<128x512xf32> to vector<128x512xbf16>
    %c0_7 = arith.constant 0 : index
    %c0_8 = arith.constant 0 : index
    %11 = vector.load %arg8[%c0_7, %c0_8] : memref<256x512xbf16, #tpu.memory_space<vmem>>, vector<256x512xbf16>
    %cst_9 = arith.constant dense<0.000000e+00> : vector<128x256xf32>
    %12 = tpu.matmul %10, %11, %cst_9 {dimension_numbers = #tpu.dot_dimension_numbers<[1], [1], [0], [0], [0, 0, 1, 0], [], []>} : vector<128x512xbf16>, vector<256x512xbf16>, vector<128x256xf32> -> vector<128x256xf32>
    %13 = arith.addf %9, %12 : vector<128x256xf32>
    %c0_10 = arith.constant 0 : index
    %c0_11 = arith.constant 0 : index
    %14 = vector.load %arg12[%c0_10, %c0_11] : memref<128x256xf32, #tpu.memory_space<vmem>>, vector<128x256xf32>
    tpu.vector_store %arg12[%c0_10, %c0_11], %13 {strides = array<i32>} : memref<128x256xf32, #tpu.memory_space<vmem>>, vector<128x256xf32>,
    %c1_i32 = arith.constant 1 : i32
    %15 = arith.cmpi eq, %arg1, %c1_i32 : i32
    %16 = arith.extui %15 : i1 to i32
    %c0_i32_12 = arith.constant 0 : i32
    %17 = arith.cmpi ne, %16, %c0_i32_12 : i32
    scf.if %17 {
      %c0_13 = arith.constant 0 : index
      %c0_14 = arith.constant 0 : index
      %18 = vector.load %arg11[%c0_13, %c0_14] : memref<128x256xf32, #tpu.memory_space<vmem>>, vector<128x256xf32>
      %c0_15 = arith.constant 0 : index
      %c0_16 = arith.constant 0 : index
      %19 = vector.load %arg12[%c0_15, %c0_16] : memref<128x256xf32, #tpu.memory_space<vmem>>, vector<128x256xf32>
      %20 = arith.mulf %18, %19 : vector<128x256xf32>
      %c0_17 = arith.constant 0 : index
      %c0_18 = arith.constant 0 : index
      %21 = vector.load %arg9[%c0_17, %c0_18] : memref<128x256xf32, #tpu.memory_space<vmem>>, vector<128x256xf32>
      tpu.vector_store %arg9[%c0_17, %c0_18], %20 {strides = array<i32>} : memref<128x256xf32, #tpu.memory_space<vmem>>, vector<128x256xf32>,
    } else {
    }
    return
  }
  func.func @transform_0(%arg0: i32, %arg1: i32) -> (i32, i32) {
    %c0_i32 = arith.constant 0 : i32
    %c0_i32_0 = arith.constant 0 : i32
    return %arg0, %c0_i32 : i32, i32
  }
  func.func @transform_1(%arg0: i32, %arg1: i32) -> (i32, i32) {
    %c0_i32 = arith.constant 0 : i32
    %c0_i32_0 = arith.constant 0 : i32
    return %arg0, %c0_i32 : i32, i32
  }
  func.func @transform_2(%arg0: i32, %arg1: i32) -> (i32, i32) {
    %c0_i32 = arith.constant 0 : i32
    %c0_i32_0 = arith.constant 0 : i32
    %c0_i32_1 = arith.constant 0 : i32
    return %c0_i32, %c0_i32_0 : i32, i32
  }
  func.func @transform_3(%arg0: i32, %arg1: i32) -> (i32, i32) {
    %c0_i32 = arith.constant 0 : i32
    %c0_i32_0 = arith.constant 0 : i32
    %c0_i32_1 = arith.constant 0 : i32
    return %c0_i32, %c0_i32_0 : i32, i32
  }
  func.func @transform_4(%arg0: i32, %arg1: i32) -> (i32, i32) {
    %c0_i32 = arith.constant 0 : i32
    %c0_i32_0 = arith.constant 0 : i32
    return %arg1, %c0_i32 : i32, i32
  }
  func.func @transform_5(%arg0: i32, %arg1: i32) -> (i32, i32) {
    %c0_i32 = arith.constant 0 : i32
    %c0_i32_0 = arith.constant 0 : i32
    %c0_i32_1 = arith.constant 0 : i32
    return %c0_i32, %c0_i32_0 : i32, i32
  }
  func.func @transform_6(%arg0: i32, %arg1: i32) -> (i32, i32) {
    %c0_i32 = arith.constant 0 : i32
    %c0_i32_0 = arith.constant 0 : i32
    return %c0_i32, %arg1 : i32, i32
  }
  func.func @transform_7(%arg0: i32, %arg1: i32) -> (i32, i32) {
    %c0_i32 = arith.constant 0 : i32
    %c0_i32_0 = arith.constant 0 : i32
    return %arg0, %c0_i32 : i32, i32
  }
}

</mosaic_0001>

<llo_original>
// kernel: tpu_custom_call.1
$region0: #{tpu_custom_call.1}
  #allocation0 [shape = 'u32[]', space=smem, size = 0x4, offset = 0x4, fixed_abs, tag = 'smem constant byte address 0x4 - core index']
  #allocation1 [shape = 'u32[144,128]{1,0:T(1,128)}', space=vmem, size = 0x12000, scoped, tag = 'internal scratch']
  #allocation2 [shape = 'bf16[128,256]{1,0:T(8,128)(2,1)}', space=vmem, size = 0x10000, scoped, tag = 'scratch operand']
  #allocation3 [shape = 'f32[128,256]{1,0:T(8,128)}', space=vmem, size = 0x20000, scoped, tag = 'scratch operand']
  #allocation4 [shape = 'f32[128,256]{1,0:T(8,128)}', space=vmem, size = 0x20000, scoped, tag = 'scratch operand']
  %s0 = inlined_call_operand.hbm [shape: f32[256,256], index: 0, kind: input, shape index: {}]
  %s1 = inlined_call_operand.hbm [shape: f32[256,256], index: 1, kind: input, shape index: {}]
  %s2 = inlined_call_operand.vmem [shape: f32[1,256], index: 2, kind: input, shape index: {}]
  %s3 = inlined_call_operand.vmem [shape: f32[1,256], index: 3, kind: input, shape index: {}]
  %s4 = inlined_call_operand.hbm [shape: bf16[1024,256], index: 4, kind: input, shape index: {}]
  %s5 = inlined_call_operand.hbm [shape: bf16[256,256], index: 5, kind: input, shape index: {}]
  %s6 = inlined_call_operand.hbm [shape: bf16[256,1024], index: 6, kind: input, shape index: {}]
  %s7 = inlined_call_operand.hbm [shape: f32[256,256], index: 7, kind: output, shape index: {}]
  %s8 = sld [smem:[#allocation0]]
  $region89: #{tpu_custom_call.1} parent=0
    _
  %s10 = ssub.s32 1, %s8
  %s11 = scalar_select 0, %s10, %s8
  $region1: #{tpu_custom_call.1} parent=0
    #allocation5 [shape = 'u8[262144]{0}', space=vmem, size = 0x40000, scoped, tag = 'input window, operand 0']
    #allocation6 [shape = 's32[2]{0}', space=sflag, size = 0x8, scoped, tag = 'scoped memory for tpu_custom_call.1']
    #allocation7 [shape = 's32[2]{0}', space=sflag, size = 0x8, scoped, tag = 'scoped memory for tpu_custom_call.1']
    #allocation8 [shape = 'u8[262144]{0}', space=vmem, size = 0x40000, scoped, tag = 'input window, operand 1']
    #allocation9 [shape = 's32[2]{0}', space=sflag, size = 0x8, scoped, tag = 'scoped memory for tpu_custom_call.1']
    #allocation10 [shape = 'u8[524288]{0}', space=vmem, size = 0x80000, scoped, tag = 'input window, operand 4']
    #allocation11 [shape = 'u8[131072]{0}', space=vmem, size = 0x20000, scoped, tag = 'input window, operand 5, single buffered']
    #allocation12 [shape = 's32[1]{0}', space=sflag, size = 0x4, scoped, tag = 'scoped memory for tpu_custom_call.1']
    #allocation13 [shape = 'u8[524288]{0}', space=vmem, size = 0x80000, scoped, tag = 'input window, operand 6']
    #allocation14 [shape = 'u8[262144]{0}', space=vmem, size = 0x40000, scoped, tag = 'output window, operand 0']
    %12 = vsyncpa [#allocation6], 0
    %s13 = scalar_lea.sflag [#allocation6], 1
    %14 = vsyncpa %s13, 0
    %15 = vsyncpa [#allocation9], 0
    %s16 = scalar_lea.sflag [#allocation9], 1
    %17 = vsyncpa %s16, 0
    %18 = vsyncpa [#allocation12], 0
    %19 = vsyncpa [#allocation7], 0
    %s20 = scalar_lea.sflag [#allocation7], 1
    %21 = vsyncpa %s20, 0
    loop: start=0, step=1, limit=6
    $region2: #{tpu_custom_call.1} parent=1 // loop_pre_header
      _
    $region3: #{tpu_custom_call.1} parent=1 // loop_header
      %s23 = sphi 0, %s27
      %p24 = scmp.ge.s32.totalorder %s23, 6
      %s30 = sphi 0, %s42
      %s31 = sphi 0, %s38
      %s32 = sphi 0, %s30
      %s33 = sphi 0, %s31
      %s34 = sphi 0, %s32
      %s35 = sphi 0, %s33
      %s45 = sphi 0, %s47
      %s48 = sphi 0, %s45
      %s49 = sphi 0, %s48
      %s65 = sphi 0, %s49
      %s71 = sphi 0, %s73
      %s74 = sphi 0, %s71
      %s75 = sphi 0, %s74
      %s91 = sphi 0, %s75
      %s95 = sphi 0, %s95
      %s97 = sphi 0, %s95
      %s98 = sphi 0, %s97
      %s112 = sphi 0, %s98
      %s116 = sphi 0, %s116
      %s118 = sphi 0, %s116
      %s119 = sphi 0, %s118
      %s133 = sphi 0, %s119
      %s139 = sphi 0, %s141
      %s142 = sphi 0, %s139
      %s143 = sphi 0, %s142
      %s159 = sphi 0, %s143
      %s163 = sphi 0, %s163
      %s165 = sphi 0, %s163
      %s166 = sphi 0, %s165
      %s180 = sphi 0, %s166
      %s186 = sphi 0, %s188
      %s189 = sphi 0, %s186
      %s190 = sphi 0, %s189
      %s206 = sphi 0, %s190
      %s212 = sphi 0, %s214
      %s215 = sphi 0, %s212
      %s216 = sphi 0, %s215
      %s232 = sphi 0, %s216
    $region4: #{tpu_custom_call.1} parent=1 // loop_header_branch
      %26 = sbr.rel (%p24) target = $region8
    $region5: #{tpu_custom_call.1} parent=1 // loop_body
      %s28 = ssub.s32 %s23, 1
      %s29 = ssub.s32 %s23, 2
      %s36 = sadd.s32 1, %s31
      %p37 = scmp.ge.s32.totalorder %s36, 2
      %s38 = scalar_select %p37, 0, %s36
      %s39 = sadd.s32 1, %s30
      %s40 = scalar_select %p37, %s39, %s30
      %p41 = scmp.ge.s32.totalorder %s40, 2
      %s42 = scalar_select %p41, 0, %s40
      %s43 = ssub.s32 %s30, %s42
      %p44 = scmp.eq.s32.totalorder %s43, 0
      %s46 = sadd.s32 %s45, 1
      %s47 = scalar_select %p44, %s45, %s46
      %p50 = pneg %p44
      %p51 = scmp.eq.s32.totalorder %s23, 3
      %p52 = por %p50, %p51
      %p53 = scmp.ne.s32.totalorder %s45, %s48
      %p54 = scmp.eq.s32.totalorder %s23, 0
      %p55 = por %p53, %p54
      %p56 = scmp.ne.s32.totalorder %s45, %s48
      %p57 = scmp.eq.s32.totalorder %s28, 3
      %p58 = por %p56, %p57
      %p59 = scmp.ne.s32.totalorder %s48, %s49
      %p60 = scmp.eq.s32.totalorder %s28, 0
      %p61 = por %p59, %p60
      %p62 = scmp.ne.s32.totalorder %s48, %s49
      %p63 = scmp.eq.s32.totalorder %s29, 3
      %p64 = por %p62, %p63
      %p66 = scmp.ne.s32.totalorder %s49, %s65
      %p67 = scmp.eq.s32.totalorder %s29, 0
      %p68 = por %p66, %p67
      %s69 = ssub.s32 %s30, %s42
      %p70 = scmp.eq.s32.totalorder %s69, 0
      %s72 = sadd.s32 %s71, 1
      %s73 = scalar_select %p70, %s71, %s72
      %p76 = pneg %p70
      %p77 = scmp.eq.s32.totalorder %s23, 3
      %p78 = por %p76, %p77
      %p79 = scmp.ne.s32.totalorder %s71, %s74
      %p80 = scmp.eq.s32.totalorder %s23, 0
      %p81 = por %p79, %p80
      %p82 = scmp.ne.s32.totalorder %s71, %s74
      %p83 = scmp.eq.s32.totalorder %s28, 3
      %p84 = por %p82, %p83
      %p85 = scmp.ne.s32.totalorder %s74, %s75
      %p86 = scmp.eq.s32.totalorder %s28, 0
      %p87 = por %p85, %p86
      %p88 = scmp.ne.s32.totalorder %s74, %s75
      %p89 = scmp.eq.s32.totalorder %s29, 3
      %p90 = por %p88, %p89
      %p92 = scmp.ne.s32.totalorder %s75, %s91
      %p93 = scmp.eq.s32.totalorder %s29, 0
      %p94 = por %p92, %p93
      %s96 = sadd.s32 %s95, 1
      %p99 = scmp.eq.s32.totalorder %s23, 3
      %p100 = scmp.ne.s32.totalorder %s95, %s97
      %p101 = scmp.eq.s32.totalorder %s23, 0
      %p102 = por %p100, %p101
      %p103 = scmp.ne.s32.totalorder %s95, %s97
      %p104 = scmp.eq.s32.totalorder %s28, 3
      %p105 = por %p103, %p104
      %p106 = scmp.ne.s32.totalorder %s97, %s98
      %p107 = scmp.eq.s32.totalorder %s28, 0
      %p108 = por %p106, %p107
      %p109 = scmp.ne.s32.totalorder %s97, %s98
      %p110 = scmp.eq.s32.totalorder %s29, 3
      %p111 = por %p109, %p110
      %p113 = scmp.ne.s32.totalorder %s98, %s112
      %p114 = scmp.eq.s32.totalorder %s29, 0
      %p115 = por %p113, %p114
      %s117 = sadd.s32 %s116, 1
      %p120 = scmp.eq.s32.totalorder %s23, 3
      %p121 = scmp.ne.s32.totalorder %s116, %s118
      %p122 = scmp.eq.s32.totalorder %s23, 0
      %p123 = por %p121, %p122
      %p124 = scmp.ne.s32.totalorder %s116, %s118
      %p125 = scmp.eq.s32.totalorder %s28, 3
      %p126 = por %p124, %p125
      %p127 = scmp.ne.s32.totalorder %s118, %s119
      %p128 = scmp.eq.s32.totalorder %s28, 0
      %p129 = por %p127, %p128
      %p130 = scmp.ne.s32.totalorder %s118, %s119
      %p131 = scmp.eq.s32.totalorder %s29, 3
      %p132 = por %p130, %p131
      %p134 = scmp.ne.s32.totalorder %s119, %s133
      %p135 = scmp.eq.s32.totalorder %s29, 0
      %p136 = por %p134, %p135
      %s137 = ssub.s32 %s31, %s38
      %p138 = scmp.eq.s32.totalorder %s137, 0
      %s140 = sadd.s32 %s139, 1
      %s141 = scalar_select %p138, %s139, %s140
      %p144 = pneg %p138
      %p145 = scmp.eq.s32.totalorder %s23, 3
      %p146 = por %p144, %p145
      %p147 = scmp.ne.s32.totalorder %s139, %s142
      %p148 = scmp.eq.s32.totalorder %s23, 0
      %p149 = por %p147, %p148
      %p150 = scmp.ne.s32.totalorder %s139, %s142
      %p151 = scmp.eq.s32.totalorder %s28, 3
      %p152 = por %p150, %p151
      %p153 = scmp.ne.s32.totalorder %s142, %s143
      %p154 = scmp.eq.s32.totalorder %s28, 0
      %p155 = por %p153, %p154
      %p156 = scmp.ne.s32.totalorder %s142, %s143
      %p157 = scmp.eq.s32.totalorder %s29, 3
      %p158 = por %p156, %p157
      %p160 = scmp.ne.s32.totalorder %s143, %s159
      %p161 = scmp.eq.s32.totalorder %s29, 0
      %p162 = por %p160, %p161
      %s164 = sadd.s32 %s163, 1
      %p167 = scmp.eq.s32.totalorder %s23, 3
      %p168 = scmp.ne.s32.totalorder %s163, %s165
      %p169 = scmp.eq.s32.totalorder %s23, 0
      %p170 = por %p168, %p169
      %p171 = scmp.ne.s32.totalorder %s163, %s165
      %p172 = scmp.eq.s32.totalorder %s28, 3
      %p173 = por %p171, %p172
      %p174 = scmp.ne.s32.totalorder %s165, %s166
      %p175 = scmp.eq.s32.totalorder %s28, 0
      %p176 = por %p174, %p175
      %p177 = scmp.ne.s32.totalorder %s165, %s166
      %p178 = scmp.eq.s32.totalorder %s29, 3
      %p179 = por %p177, %p178
      %p181 = scmp.ne.s32.totalorder %s166, %s180
      %p182 = scmp.eq.s32.totalorder %s29, 0
      %p183 = por %p181, %p182
      %s184 = ssub.s32 %s31, %s38
      %p185 = scmp.eq.s32.totalorder %s184, 0
      %s187 = sadd.s32 %s186, 1
      %s188 = scalar_select %p185, %s186, %s187
      %p191 = pneg %p185
      %p192 = scmp.eq.s32.totalorder %s23, 3
      %p193 = por %p191, %p192
      %p194 = scmp.ne.s32.totalorder %s186, %s189
      %p195 = scmp.eq.s32.totalorder %s23, 0
      %p196 = por %p194, %p195
      %p197 = scmp.ne.s32.totalorder %s186, %s189
      %p198 = scmp.eq.s32.totalorder %s28, 3
      %p199 = por %p197, %p198
      %p200 = scmp.ne.s32.totalorder %s189, %s190
      %p201 = scmp.eq.s32.totalorder %s28, 0
      %p202 = por %p200, %p201
      %p203 = scmp.ne.s32.totalorder %s189, %s190
      %p204 = scmp.eq.s32.totalorder %s29, 3
      %p205 = por %p203, %p204
      %p207 = scmp.ne.s32.totalorder %s190, %s206
      %p208 = scmp.eq.s32.totalorder %s29, 0
      %p209 = por %p207, %p208
      %s210 = ssub.s32 %s30, %s42
      %p211 = scmp.eq.s32.totalorder %s210, 0
      %s213 = sadd.s32 %s212, 1
      %s214 = scalar_select %p211, %s212, %s213
      %p217 = pneg %p211
      %p218 = scmp.eq.s32.totalorder %s23, 3
      %p219 = por %p217, %p218
      %p220 = scmp.ne.s32.totalorder %s212, %s215
      %p221 = scmp.eq.s32.totalorder %s23, 0
      %p222 = por %p220, %p221
      %p223 = scmp.ne.s32.totalorder %s212, %s215
      %p224 = scmp.eq.s32.totalorder %s28, 3
      %p225 = por %p223, %p224
      %p226 = scmp.ne.s32.totalorder %s215, %s216
      %p227 = scmp.eq.s32.totalorder %s28, 0
      %p228 = por %p226, %p227
      %p229 = scmp.ne.s32.totalorder %s215, %s216
      %p230 = scmp.eq.s32.totalorder %s29, 3
      %p231 = por %p229, %p230
      %p233 = scmp.ne.s32.totalorder %s216, %s232
      %p234 = scmp.eq.s32.totalorder %s29, 0
      %p235 = por %p233, %p234
      %p236 = scmp.le.s32.totalorder 1, %s23
      %p237 = scmp.lt.s32.totalorder %s23, 5
      %p238 = pnand %p236, %p237
      %p239 = pneg %p238
      // Predicated region
      $region9: #{tpu_custom_call.1} parent=5 // pred_check
        _
      $region10: #{tpu_custom_call.1} parent=5 // pred_check_branch
        %241 = sbr.rel (%p238) target = $region12
      $region11: #{tpu_custom_call.1} parent=5 // pred_region
        %s242 = ssub.s32 %s23, 1
        // Predicated region
        $region13: #{tpu_custom_call.1} parent=11 // pred_check
          %p243 = pneg %p108
        $region14: #{tpu_custom_call.1} parent=11 // pred_check_branch
          %245 = sbr.rel (%p243) target = $region16
        $region15: #{tpu_custom_call.1} parent=11 // pred_region
          _
        $region16: #{tpu_custom_call.1} parent=11 // pred_fallthru
          _
        // Predicated region
        $region17: #{tpu_custom_call.1} parent=11 // pred_check
          %p246 = pneg %p129
        $region18: #{tpu_custom_call.1} parent=11 // pred_check_branch
          %248 = sbr.rel (%p246) target = $region20
        $region19: #{tpu_custom_call.1} parent=11 // pred_region
          _
        $region20: #{tpu_custom_call.1} parent=11 // pred_fallthru
          _
        // Predicated region
        $region21: #{tpu_custom_call.1} parent=11 // pred_check
          %p249 = pneg %p176
        $region22: #{tpu_custom_call.1} parent=11 // pred_check_branch
          %251 = sbr.rel (%p249) target = $region24
        $region23: #{tpu_custom_call.1} parent=11 // pred_region
          %s253 = ssub.s32 4096, 4096
          %254 = vsyncadd [#allocation12], %s253
          %s255 = sshll.u32 [#allocation11], 4
          %s256 = int_to_ptr.vmem [resolvable:$true] %s255
          %261 = dma.hbm_to_vmem [thread:$0]  %s5, 4096, %s256, [#allocation12], 128, 128, 8
        $region24: #{tpu_custom_call.1} parent=11 // pred_fallthru
          _
      $region12: #{tpu_custom_call.1} parent=5 // pred_fallthru
        _
      %p262 = scmp.lt.s32.totalorder %s23, 4
      // Predicated region
      $region25: #{tpu_custom_call.1} parent=5 // pred_check
        %p263 = pneg %p262
      $region26: #{tpu_custom_call.1} parent=5 // pred_check_branch
        %265 = sbr.rel (%p263) target = $region28
      $region27: #{tpu_custom_call.1} parent=5 // pred_region
        // Predicated region
        $region29: #{tpu_custom_call.1} parent=27 // pred_check
          %p266 = pneg %p55
        $region30: #{tpu_custom_call.1} parent=27 // pred_check_branch
          %268 = sbr.rel (%p266) target = $region32
        $region31: #{tpu_custom_call.1} parent=27 // pred_region
          %s269 = sand.u32 %s23, 1
          %s270 = scalar_lea.sflag [#allocation6], %s269
          %s271 = sand.u32 %s45, 1
          %s272 = smul.addr %s271, 256
          %s273 = scalar_lea.vmem [#allocation5], %s272
          %s274 = smul.u32 16, %s30
          %s276 = ssub.s32 4096, 4096
          %277 = vsyncadd %s270, %s276
          %s278 = smul.addr %s274, 2
          %s279 = smul.addr %s278, 128
          %s280 = scalar_lea.hbm %s0, %s279
          %s281 = sshll.u32 %s273, 4
          %s282 = int_to_ptr.vmem [resolvable:$true] %s281
          %287 = dma.hbm_to_vmem [thread:$0]  %s280, 4096, %s282, %s270, 256, 256, 16
        $region32: #{tpu_custom_call.1} parent=27 // pred_fallthru
          _
        // Predicated region
        $region33: #{tpu_custom_call.1} parent=27 // pred_check
          %p288 = pneg %p81
        $region34: #{tpu_custom_call.1} parent=27 // pred_check_branch
          %290 = sbr.rel (%p288) target = $region36
        $region35: #{tpu_custom_call.1} parent=27 // pred_region
          %s291 = sand.u32 %s23, 1
          %s292 = scalar_lea.sflag [#allocation9], %s291
          %s293 = sand.u32 %s71, 1
          %s294 = smul.addr %s293, 256
          %s295 = scalar_lea.vmem [#allocation8], %s294
          %s296 = smul.u32 16, %s30
          %s298 = ssub.s32 4096, 4096
          %299 = vsyncadd %s292, %s298
          %s300 = smul.addr %s296, 2
          %s301 = smul.addr %s300, 128
          %s302 = scalar_lea.hbm %s1, %s301
          %s303 = sshll.u32 %s295, 4
          %s304 = int_to_ptr.vmem [resolvable:$true] %s303
          %309 = dma.hbm_to_vmem [thread:$0]  %s302, 4096, %s304, %s292, 256, 256, 16
        $region36: #{tpu_custom_call.1} parent=27 // pred_fallthru
          _
        // Predicated region
        $region37: #{tpu_custom_call.1} parent=27 // pred_check
          %p310 = pneg %p149
        $region38: #{tpu_custom_call.1} parent=27 // pred_check_branch
          %312 = sbr.rel (%p310) target = $region40
        $region39: #{tpu_custom_call.1} parent=27 // pred_region
          %s313 = sand.u32 %s23, 1
          %s314 = scalar_lea.sflag [#allocation9], %s313
          %s315 = sand.u32 %s139, 1
          %s316 = smul.addr %s315, 512
          %s317 = scalar_lea.vmem [#allocation10], %s316
          %s318 = smul.u32 64, %s31
          %s320 = ssub.s32 8192, 8192
          %321 = vsyncadd %s314, %s320
          %s322 = smul.addr %s318, 2
          %s323 = smul.addr %s322, 64
          %s324 = scalar_lea.hbm %s4, %s323
          %s325 = sshll.u32 %s317, 4
          %s326 = int_to_ptr.vmem [resolvable:$true] %s325
          %331 = dma.hbm_to_vmem [thread:$0]  %s324, 8192, %s326, %s314, 128, 128, 8
        $region40: #{tpu_custom_call.1} parent=27 // pred_fallthru
          _
        // Predicated region
        $region41: #{tpu_custom_call.1} parent=27 // pred_check
          %p332 = pneg %p196
        $region42: #{tpu_custom_call.1} parent=27 // pred_check_branch
          %334 = sbr.rel (%p332) target = $region44
        $region43: #{tpu_custom_call.1} parent=27 // pred_region
          %s335 = sand.u32 %s23, 1
          %s336 = scalar_lea.sflag [#allocation6], %s335
          %s337 = sand.u32 %s186, 1
          %s338 = smul.addr %s337, 512
          %s339 = scalar_lea.vmem [#allocation13], %s338
          %s340 = smul.u32 4, %s31
          %s342 = ssub.s32 8192, 8192
          %343 = vsyncadd %s336, %s342
          %s344 = smul.addr %s340, 64
          %s345 = scalar_lea.hbm %s6, %s344
          %s346 = sshll.u32 %s339, 4
          %s347 = int_to_ptr.vmem [resolvable:$true] %s346
          %352 = dma.hbm_to_vmem [thread:$0]  %s345, 8192, %s347, %s336, 512, 256, 16
        $region44: #{tpu_custom_call.1} parent=27 // pred_fallthru
          _
      $region28: #{tpu_custom_call.1} parent=5 // pred_fallthru
        _
      %p353 = scmp.le.s32.totalorder 1, %s23
      %p354 = scmp.lt.s32.totalorder %s23, 5
      %p355 = pnand %p353, %p354
      %p356 = pneg %p355
      // Predicated region
      $region45: #{tpu_custom_call.1} parent=5 // pred_check
        _
      $region46: #{tpu_custom_call.1} parent=5 // pred_check_branch
        %358 = sbr.rel (%p355) target = $region48
      $region47: #{tpu_custom_call.1} parent=5 // pred_region
        %s359 = ssub.s32 %s23, 1
        %s360 = sand.u32 %s28, 1
        %s361 = scalar_lea.sflag [#allocation6], %s360
        %s362 = sand.u32 %s48, 1
        %s363 = smul.addr %s362, 256
        %s364 = scalar_lea.vmem [#allocation5], %s363
        // Predicated region
        $region49: #{tpu_custom_call.1} parent=47 // pred_check
          %p365 = pneg %p61
        $region50: #{tpu_custom_call.1} parent=47 // pred_check_branch
          %367 = sbr.rel (%p365) target = $region52
        $region51: #{tpu_custom_call.1} parent=47 // pred_region
          %368 = dma.done %s361, 4096
        $region52: #{tpu_custom_call.1} parent=47 // pred_fallthru
          _
        %s369 = sand.u32 %s28, 1
        %s370 = scalar_lea.sflag [#allocation9], %s369
        %s371 = sand.u32 %s74, 1
        %s372 = smul.addr %s371, 256
        %s373 = scalar_lea.vmem [#allocation8], %s372
        // Predicated region
        $region53: #{tpu_custom_call.1} parent=47 // pred_check
          %p374 = pneg %p87
        $region54: #{tpu_custom_call.1} parent=47 // pred_check_branch
          %376 = sbr.rel (%p374) target = $region56
        $region55: #{tpu_custom_call.1} parent=47 // pred_region
          %377 = dma.done %s370, 4096
        $region56: #{tpu_custom_call.1} parent=47 // pred_fallthru
          _
        %s378 = sand.u32 %s28, 1
        %s379 = scalar_lea.sflag [#allocation9], %s378
        %s380 = sand.u32 %s142, 1
        %s381 = smul.addr %s380, 512
        %s382 = scalar_lea.vmem [#allocation10], %s381
        // Predicated region
        $region57: #{tpu_custom_call.1} parent=47 // pred_check
          %p383 = pneg %p155
        $region58: #{tpu_custom_call.1} parent=47 // pred_check_branch
          %385 = sbr.rel (%p383) target = $region60
        $region59: #{tpu_custom_call.1} parent=47 // pred_region
          %386 = dma.done %s379, 8192
        $region60: #{tpu_custom_call.1} parent=47 // pred_fallthru
          _
        // Predicated region
        $region61: #{tpu_custom_call.1} parent=47 // pred_check
          %p387 = pneg %p176
        $region62: #{tpu_custom_call.1} parent=47 // pred_check_branch
          %389 = sbr.rel (%p387) target = $region64
        $region63: #{tpu_custom_call.1} parent=47 // pred_region
          %390 = dma.done [#allocation12], 4096
        $region64: #{tpu_custom_call.1} parent=47 // pred_fallthru
          _
        %s391 = sand.u32 %s28, 1
        %s392 = scalar_lea.sflag [#allocation6], %s391
        %s393 = sand.u32 %s189, 1
        %s394 = smul.addr %s393, 512
        %s395 = scalar_lea.vmem [#allocation13], %s394
        // Predicated region
        $region65: #{tpu_custom_call.1} parent=47 // pred_check
          %p396 = pneg %p202
        $region66: #{tpu_custom_call.1} parent=47 // pred_check_branch
          %398 = sbr.rel (%p396) target = $region68
        $region67: #{tpu_custom_call.1} parent=47 // pred_region
          %399 = dma.done %s392, 8192
        $region68: #{tpu_custom_call.1} parent=47 // pred_fallthru
          _
        %s400 = sand.u32 %s28, 1
        %s401 = scalar_lea.sflag [#allocation6], %s400
        %s402 = sand.u32 %s48, 1
        %s403 = smul.addr %s402, 256
        %s404 = scalar_lea.vmem [#allocation5], %s403
        %p405 = pneg %p61
        %p406 = pneg %p58
        %s407 = sand.u32 %s28, 1
        %s408 = scalar_lea.sflag [#allocation9], %s407
        %s409 = sand.u32 %s74, 1
        %s410 = smul.addr %s409, 256
        %s411 = scalar_lea.vmem [#allocation8], %s410
        %p412 = pneg %p87
        %p413 = pneg %p84
        %p414 = pneg %p108
        %p415 = pneg %p105
        %p416 = pneg %p129
        %p417 = pneg %p126
        %s418 = sand.u32 %s28, 1
        %s419 = scalar_lea.sflag [#allocation9], %s418
        %s420 = sand.u32 %s142, 1
        %s421 = smul.addr %s420, 512
        %s422 = scalar_lea.vmem [#allocation10], %s421
        %p423 = pneg %p155
        %p424 = pneg %p152
        %p425 = pneg %p176
        %p426 = pneg %p173
        %s427 = sand.u32 %s28, 1
        %s428 = scalar_lea.sflag [#allocation6], %s427
        %s429 = sand.u32 %s189, 1
        %s430 = smul.addr %s429, 512
        %s431 = scalar_lea.vmem [#allocation13], %s430
        %p432 = pneg %p202
        %p433 = pneg %p199
        %p434 = pneg %p228
        %p435 = pneg %p225
        %s436 = sand.u32 %s215, 1
        %s437 = scalar_lea.sflag [#allocation7], %s436
        %s438 = sand.u32 %s215, 1
        %s439 = smul.addr %s438, 256
        %s440 = scalar_lea.vmem [#allocation14], %s439
        %s441 = smul.u32 16, %s32
        %s442 = smul.u32 16, %s32
        %s443 = smul.u32 64, %s33
        %s444 = smul.u32 4, %s33
        %s445 = smul.u32 16, %s32
        %p446 = scmp.eq.s32.totalorder %s33, 0
        // Predicated region
        $region69: #{tpu_custom_call.1} parent=47 // pred_check
          %p447 = pneg %p446
        $region70: #{tpu_custom_call.1} parent=47 // pred_check_branch
          %449 = sbr.rel (%p447) target = $region72
        $region71: #{tpu_custom_call.1} parent=47 // pred_region
          %v450 = vld [vmem:[%s364] sm:$0xff]
          %v451 = vld [vmem:[%s364 + $0x8] sm:$0xff]
          %v452 = vld [vmem:[%s364 + $0x10] sm:$0xff]
          %v453 = vld [vmem:[%s364 + $0x18] sm:$0xff]
          %v454 = vld [vmem:[%s364 + $0x20] sm:$0xff]
          %v455 = vld [vmem:[%s364 + $0x28] sm:$0xff]
          %v456 = vld [vmem:[%s364 + $0x30] sm:$0xff]
          %v457 = vld [vmem:[%s364 + $0x38] sm:$0xff]
          %v458 = vld [vmem:[%s364 + $0x40] sm:$0xff]
          %v459 = vld [vmem:[%s364 + $0x48] sm:$0xff]
          %v460 = vld [vmem:[%s364 + $0x50] sm:$0xff]
          %v461 = vld [vmem:[%s364 + $0x58] sm:$0xff]
          %v462 = vld [vmem:[%s364 + $0x60] sm:$0xff]
          %v463 = vld [vmem:[%s364 + $0x68] sm:$0xff]
          %v464 = vld [vmem:[%s364 + $0x70] sm:$0xff]
          %v465 = vld [vmem:[%s364 + $0x78] sm:$0xff]
          %v466 = vld [vmem:[%s364 + $0x80] sm:$0xff]
          %v467 = vld [vmem:[%s364 + $0x88] sm:$0xff]
          %v468 = vld [vmem:[%s364 + $0x90] sm:$0xff]
          %v469 = vld [vmem:[%s364 + $0x98] sm:$0xff]
          %v470 = vld [vmem:[%s364 + $0xa0] sm:$0xff]
          %v471 = vld [vmem:[%s364 + $0xa8] sm:$0xff]
          %v472 = vld [vmem:[%s364 + $0xb0] sm:$0xff]
          %v473 = vld [vmem:[%s364 + $0xb8] sm:$0xff]
          %v474 = vld [vmem:[%s364 + $0xc0] sm:$0xff]
          %v475 = vld [vmem:[%s364 + $0xc8] sm:$0xff]
          %v476 = vld [vmem:[%s364 + $0xd0] sm:$0xff]
          %v477 = vld [vmem:[%s364 + $0xd8] sm:$0xff]
          %v478 = vld [vmem:[%s364 + $0xe0] sm:$0xff]
          %v479 = vld [vmem:[%s364 + $0xe8] sm:$0xff]
          %v480 = vld [vmem:[%s364 + $0xf0] sm:$0xff]
          %v481 = vld [vmem:[%s364 + $0xf8] sm:$0xff]
          %v482 = vld [vmem:[%s373] sm:$0xff]
          %v483 = vld [vmem:[%s373 + $0x8] sm:$0xff]
          %v484 = vld [vmem:[%s373 + $0x10] sm:$0xff]
          %v485 = vld [vmem:[%s373 + $0x18] sm:$0xff]
          %v486 = vld [vmem:[%s373 + $0x20] sm:$0xff]
          %v487 = vld [vmem:[%s373 + $0x28] sm:$0xff]
          %v488 = vld [vmem:[%s373 + $0x30] sm:$0xff]
          %v489 = vld [vmem:[%s373 + $0x38] sm:$0xff]
          %v490 = vld [vmem:[%s373 + $0x40] sm:$0xff]
          %v491 = vld [vmem:[%s373 + $0x48] sm:$0xff]
          %v492 = vld [vmem:[%s373 + $0x50] sm:$0xff]
          %v493 = vld [vmem:[%s373 + $0x58] sm:$0xff]
          %v494 = vld [vmem:[%s373 + $0x60] sm:$0xff]
          %v495 = vld [vmem:[%s373 + $0x68] sm:$0xff]
          %v496 = vld [vmem:[%s373 + $0x70] sm:$0xff]
          %v497 = vld [vmem:[%s373 + $0x78] sm:$0xff]
          %v498 = vld [vmem:[%s373 + $0x80] sm:$0xff]
          %v499 = vld [vmem:[%s373 + $0x88] sm:$0xff]
          %v500 = vld [vmem:[%s373 + $0x90] sm:$0xff]
          %v501 = vld [vmem:[%s373 + $0x98] sm:$0xff]
          %v502 = vld [vmem:[%s373 + $0xa0] sm:$0xff]
          %v503 = vld [vmem:[%s373 + $0xa8] sm:$0xff]
          %v504 = vld [vmem:[%s373 + $0xb0] sm:$0xff]
          %v505 = vld [vmem:[%s373 + $0xb8] sm:$0xff]
          %v506 = vld [vmem:[%s373 + $0xc0] sm:$0xff]
          %v507 = vld [vmem:[%s373 + $0xc8] sm:$0xff]
          %v508 = vld [vmem:[%s373 + $0xd0] sm:$0xff]
          %v509 = vld [vmem:[%s373 + $0xd8] sm:$0xff]
          %v510 = vld [vmem:[%s373 + $0xe0] sm:$0xff]
          %v511 = vld [vmem:[%s373 + $0xe8] sm:$0xff]
          %v512 = vld [vmem:[%s373 + $0xf0] sm:$0xff]
          %v513 = vld [vmem:[%s373 + $0xf8] sm:$0xff]
          %v514 = vsub.f32 %v450, %v482
          %v515 = vsub.f32 %v451, %v483
          %v516 = vsub.f32 %v452, %v484
          %v517 = vsub.f32 %v453, %v485
          %v518 = vsub.f32 %v454, %v486
          %v519 = vsub.f32 %v455, %v487
          %v520 = vsub.f32 %v456, %v488
          %v521 = vsub.f32 %v457, %v489
          %v522 = vsub.f32 %v458, %v490
          %v523 = vsub.f32 %v459, %v491
          %v524 = vsub.f32 %v460, %v492
          %v525 = vsub.f32 %v461, %v493
          %v526 = vsub.f32 %v462, %v494
          %v527 = vsub.f32 %v463, %v495
          %v528 = vsub.f32 %v464, %v496
          %v529 = vsub.f32 %v465, %v497
          %v530 = vsub.f32 %v466, %v498
          %v531 = vsub.f32 %v467, %v499
          %v532 = vsub.f32 %v468, %v500
          %v533 = vsub.f32 %v469, %v501
          %v534 = vsub.f32 %v470, %v502
          %v535 = vsub.f32 %v471, %v503
          %v536 = vsub.f32 %v472, %v504
          %v537 = vsub.f32 %v473, %v505
          %v538 = vsub.f32 %v474, %v506
          %v539 = vsub.f32 %v475, %v507
          %v540 = vsub.f32 %v476, %v508
          %v541 = vsub.f32 %v477, %v509
          %v542 = vsub.f32 %v478, %v510
          %v543 = vsub.f32 %v479, %v511
          %v544 = vsub.f32 %v480, %v512
          %v545 = vsub.f32 %v481, %v513
          %v546 = vld [vmem:[%s2] sm:$0x3]
          %v548 = vlaneseq
          %v549 = vshrl.u32 %v548, 7
          %v550 = vsub.s32 0, %v549
          %v551 = vrot.slane %v546, %v550
          %v552 = vlaneseq
          %v553 = vshrl.u32 %v552, 7
          %v554 = vsub.s32 1, %v553
          %v555 = vrot.slane %v546, %v554
          %v558 = vmul.f32 %v514, %v551
          %v559 = vmul.f32 %v515, %v555
          %v560 = vmul.f32 %v516, %v551
          %v561 = vmul.f32 %v517, %v555
          %v562 = vmul.f32 %v518, %v551
          %v563 = vmul.f32 %v519, %v555
          %v564 = vmul.f32 %v520, %v551
          %v565 = vmul.f32 %v521, %v555
          %v566 = vmul.f32 %v522, %v551
          %v567 = vmul.f32 %v523, %v555
          %v568 = vmul.f32 %v524, %v551
          %v569 = vmul.f32 %v525, %v555
          %v570 = vmul.f32 %v526, %v551
          %v571 = vmul.f32 %v527, %v555
          %v572 = vmul.f32 %v528, %v551
          %v573 = vmul.f32 %v529, %v555
          %v574 = vmul.f32 %v530, %v551
          %v575 = vmul.f32 %v531, %v555
          %v576 = vmul.f32 %v532, %v551
          %v577 = vmul.f32 %v533, %v555
          %v578 = vmul.f32 %v534, %v551
          %v579 = vmul.f32 %v535, %v555
          %v580 = vmul.f32 %v536, %v551
          %v581 = vmul.f32 %v537, %v555
          %v582 = vmul.f32 %v538, %v551
          %v583 = vmul.f32 %v539, %v555
          %v584 = vmul.f32 %v540, %v551
          %v585 = vmul.f32 %v541, %v555
          %v586 = vmul.f32 %v542, %v551
          %v587 = vmul.f32 %v543, %v555
          %v588 = vmul.f32 %v544, %v551
          %v589 = vmul.f32 %v545, %v555
          %v590 = vadd.f32 %v482, %v558
          %v591 = vadd.f32 %v483, %v559
          %v592 = vadd.f32 %v484, %v560
          %v593 = vadd.f32 %v485, %v561
          %v594 = vadd.f32 %v486, %v562
          %v595 = vadd.f32 %v487, %v563
          %v596 = vadd.f32 %v488, %v564
          %v597 = vadd.f32 %v489, %v565
          %v598 = vadd.f32 %v490, %v566
          %v599 = vadd.f32 %v491, %v567
          %v600 = vadd.f32 %v492, %v568
          %v601 = vadd.f32 %v493, %v569
          %v602 = vadd.f32 %v494, %v570
          %v603 = vadd.f32 %v495, %v571
          %v604 = vadd.f32 %v496, %v572
          %v605 = vadd.f32 %v497, %v573
          %v606 = vadd.f32 %v498, %v574
          %v607 = vadd.f32 %v499, %v575
          %v608 = vadd.f32 %v500, %v576
          %v609 = vadd.f32 %v501, %v577
          %v610 = vadd.f32 %v502, %v578
          %v611 = vadd.f32 %v503, %v579
          %v612 = vadd.f32 %v504, %v580
          %v613 = vadd.f32 %v505, %v581
          %v614 = vadd.f32 %v506, %v582
          %v615 = vadd.f32 %v507, %v583
          %v616 = vadd.f32 %v508, %v584
          %v617 = vadd.f32 %v509, %v585
          %v618 = vadd.f32 %v510, %v586
          %v619 = vadd.f32 %v511, %v587
          %v620 = vadd.f32 %v512, %v588
          %v621 = vadd.f32 %v513, %v589
          %v622 = vld [vmem:[%s3] sm:$0x3]
          %v624 = vlaneseq
          %v625 = vshrl.u32 %v624, 7
          %v626 = vsub.s32 0, %v625
          %v627 = vrot.slane %v622, %v626
          %v628 = vlaneseq
          %v629 = vshrl.u32 %v628, 7
          %v630 = vsub.s32 1, %v629
          %v631 = vrot.slane %v622, %v630
          %v634 = vmul.f32 %v514, %v627
          %v635 = vmul.f32 %v515, %v631
          %v636 = vmul.f32 %v516, %v627
          %v637 = vmul.f32 %v517, %v631
          %v638 = vmul.f32 %v518, %v627
          %v639 = vmul.f32 %v519, %v631
          %v640 = vmul.f32 %v520, %v627
          %v641 = vmul.f32 %v521, %v631
          %v642 = vmul.f32 %v522, %v627
          %v643 = vmul.f32 %v523, %v631
          %v644 = vmul.f32 %v524, %v627
          %v645 = vmul.f32 %v525, %v631
          %v646 = vmul.f32 %v526, %v627
          %v647 = vmul.f32 %v527, %v631
          %v648 = vmul.f32 %v528, %v627
          %v649 = vmul.f32 %v529, %v631
          %v650 = vmul.f32 %v530, %v627
          %v651 = vmul.f32 %v531, %v631
          %v652 = vmul.f32 %v532, %v627
          %v653 = vmul.f32 %v533, %v631
          %v654 = vmul.f32 %v534, %v627
          %v655 = vmul.f32 %v535, %v631
          %v656 = vmul.f32 %v536, %v627
          %v657 = vmul.f32 %v537, %v631
          %v658 = vmul.f32 %v538, %v627
          %v659 = vmul.f32 %v539, %v631
          %v660 = vmul.f32 %v540, %v627
          %v661 = vmul.f32 %v541, %v631
          %v662 = vmul.f32 %v542, %v627
          %v663 = vmul.f32 %v543, %v631
          %v664 = vmul.f32 %v544, %v627
          %v665 = vmul.f32 %v545, %v631
          %v666 = vadd.f32 %v482, %v634
          %v667 = vadd.f32 %v483, %v635
          %v668 = vadd.f32 %v484, %v636
          %v669 = vadd.f32 %v485, %v637
          %v670 = vadd.f32 %v486, %v638
          %v671 = vadd.f32 %v487, %v639
          %v672 = vadd.f32 %v488, %v640
          %v673 = vadd.f32 %v489, %v641
          %v674 = vadd.f32 %v490, %v642
          %v675 = vadd.f32 %v491, %v643
          %v676 = vadd.f32 %v492, %v644
          %v677 = vadd.f32 %v493, %v645
          %v678 = vadd.f32 %v494, %v646
          %v679 = vadd.f32 %v495, %v647
          %v680 = vadd.f32 %v496, %v648
          %v681 = vadd.f32 %v497, %v649
          %v682 = vadd.f32 %v498, %v650
          %v683 = vadd.f32 %v499, %v651
          %v684 = vadd.f32 %v500, %v652
          %v685 = vadd.f32 %v501, %v653
          %v686 = vadd.f32 %v502, %v654
          %v687 = vadd.f32 %v503, %v655
          %v688 = vadd.f32 %v504, %v656
          %v689 = vadd.f32 %v505, %v657
          %v690 = vadd.f32 %v506, %v658
          %v691 = vadd.f32 %v507, %v659
          %v692 = vadd.f32 %v508, %v660
          %v693 = vadd.f32 %v509, %v661
          %v694 = vadd.f32 %v510, %v662
          %v695 = vadd.f32 %v511, %v663
          %v696 = vadd.f32 %v512, %v664
          %v697 = vadd.f32 %v513, %v665
          %v698 = vpack.c.bf16 %v592, %v590
          %v699 = vpack.c.bf16 %v593, %v591
          %v700 = vpack.c.bf16 %v596, %v594
          %v701 = vpack.c.bf16 %v597, %v595
          %v702 = vpack.c.bf16 %v600, %v598
          %v703 = vpack.c.bf16 %v601, %v599
          %v704 = vpack.c.bf16 %v604, %v602
          %v705 = vpack.c.bf16 %v605, %v603
          %v706 = vpack.c.bf16 %v608, %v606
          %v707 = vpack.c.bf16 %v609, %v607
          %v708 = vpack.c.bf16 %v612, %v610
          %v709 = vpack.c.bf16 %v613, %v611
          %v710 = vpack.c.bf16 %v616, %v614
          %v711 = vpack.c.bf16 %v617, %v615
          %v712 = vpack.c.bf16 %v620, %v618
          %v713 = vpack.c.bf16 %v621, %v619
          %v730 = vunpack.c.l.b16 %v698
          %v731 = vunpack.c.l.b16 %v699
          %v732 = vunpack.c.h.b16 %v698
          %v733 = vunpack.c.h.b16 %v699
          %v734 = vunpack.c.l.b16 %v700
          %v735 = vunpack.c.l.b16 %v701
          %v736 = vunpack.c.h.b16 %v700
          %v737 = vunpack.c.h.b16 %v701
          %v738 = vunpack.c.l.b16 %v702
          %v739 = vunpack.c.l.b16 %v703
          %v740 = vunpack.c.h.b16 %v702
          %v741 = vunpack.c.h.b16 %v703
          %v742 = vunpack.c.l.b16 %v704
          %v743 = vunpack.c.l.b16 %v705
          %v744 = vunpack.c.h.b16 %v704
          %v745 = vunpack.c.h.b16 %v705
          %v746 = vunpack.c.l.b16 %v706
          %v747 = vunpack.c.l.b16 %v707
          %v748 = vunpack.c.h.b16 %v706
          %v749 = vunpack.c.h.b16 %v707
          %v750 = vunpack.c.l.b16 %v708
          %v751 = vunpack.c.l.b16 %v709
          %v752 = vunpack.c.h.b16 %v708
          %v753 = vunpack.c.h.b16 %v709
          %v754 = vunpack.c.l.b16 %v710
          %v755 = vunpack.c.l.b16 %v711
          %v756 = vunpack.c.h.b16 %v710
          %v757 = vunpack.c.h.b16 %v711
          %v758 = vunpack.c.l.b16 %v712
          %v759 = vunpack.c.l.b16 %v713
          %v760 = vunpack.c.h.b16 %v712
          %v761 = vunpack.c.h.b16 %v713
          %v762 = vpack.c.b16 %v731, %v730
          %v763 = vpack.c.b16 %v733, %v732
          %v764 = vpack.c.b16 %v735, %v734
          %v765 = vpack.c.b16 %v737, %v736
          %v766 = vpack.c.b16 %v739, %v738
          %v767 = vpack.c.b16 %v741, %v740
          %v768 = vpack.c.b16 %v743, %v742
          %v769 = vpack.c.b16 %v745, %v744
          %v770 = vpack.c.b16 %v747, %v746
          %v771 = vpack.c.b16 %v749, %v748
          %v772 = vpack.c.b16 %v751, %v750
          %v773 = vpack.c.b16 %v753, %v752
          %v774 = vpack.c.b16 %v755, %v754
          %v775 = vpack.c.b16 %v757, %v756
          %v776 = vpack.c.b16 %v759, %v758
          %v777 = vpack.c.b16 %v761, %v760
          %794 = vst [vmem:[#allocation2] sm:$0xff] %v762
          %795 = vst [vmem:[#allocation2 + $0x8] sm:$0xff] %v763
          %796 = vst [vmem:[#allocation2 + $0x10] sm:$0xff] %v764
          %797 = vst [vmem:[#allocation2 + $0x18] sm:$0xff] %v765
          %798 = vst [vmem:[#allocation2 + $0x20] sm:$0xff] %v766
          %799 = vst [vmem:[#allocation2 + $0x28] sm:$0xff] %v767
          %800 = vst [vmem:[#allocation2 + $0x30] sm:$0xff] %v768
          %801 = vst [vmem:[#allocation2 + $0x38] sm:$0xff] %v769
          %802 = vst [vmem:[#allocation2 + $0x40] sm:$0xff] %v770
          %803 = vst [vmem:[#allocation2 + $0x48] sm:$0xff] %v771
          %804 = vst [vmem:[#allocation2 + $0x50] sm:$0xff] %v772
          %805 = vst [vmem:[#allocation2 + $0x58] sm:$0xff] %v773
          %806 = vst [vmem:[#allocation2 + $0x60] sm:$0xff] %v774
          %807 = vst [vmem:[#allocation2 + $0x68] sm:$0xff] %v775
          %808 = vst [vmem:[#allocation2 + $0x70] sm:$0xff] %v776
          %809 = vst [vmem:[#allocation2 + $0x78] sm:$0xff] %v777
          %v810 = vpack.c.bf16 %v668, %v666
          %v811 = vpack.c.bf16 %v669, %v667
          %v812 = vpack.c.bf16 %v672, %v670
          %v813 = vpack.c.bf16 %v673, %v671
          %v814 = vpack.c.bf16 %v676, %v674
          %v815 = vpack.c.bf16 %v677, %v675
          %v816 = vpack.c.bf16 %v680, %v678
          %v817 = vpack.c.bf16 %v681, %v679
          %v818 = vpack.c.bf16 %v684, %v682
          %v819 = vpack.c.bf16 %v685, %v683
          %v820 = vpack.c.bf16 %v688, %v686
          %v821 = vpack.c.bf16 %v689, %v687
          %v822 = vpack.c.bf16 %v692, %v690
          %v823 = vpack.c.bf16 %v693, %v691
          %v824 = vpack.c.bf16 %v696, %v694
          %v825 = vpack.c.bf16 %v697, %v695
          %v826 = vld [vmem:[#allocation11] sm:$0xff]
          %v827 = vld [vmem:[#allocation11 + $0x8] sm:$0xff]
          %v828 = vld [vmem:[#allocation11 + $0x10] sm:$0xff]
          %v829 = vld [vmem:[#allocation11 + $0x18] sm:$0xff]
          %v830 = vld [vmem:[#allocation11 + $0x20] sm:$0xff]
          %v831 = vld [vmem:[#allocation11 + $0x28] sm:$0xff]
          %v832 = vld [vmem:[#allocation11 + $0x30] sm:$0xff]
          %v833 = vld [vmem:[#allocation11 + $0x38] sm:$0xff]
          %v834 = vld [vmem:[#allocation11 + $0x40] sm:$0xff]
          %v835 = vld [vmem:[#allocation11 + $0x48] sm:$0xff]
          %v836 = vld [vmem:[#allocation11 + $0x50] sm:$0xff]
          %v837 = vld [vmem:[#allocation11 + $0x58] sm:$0xff]
          %v838 = vld [vmem:[#allocation11 + $0x60] sm:$0xff]
          %v839 = vld [vmem:[#allocation11 + $0x68] sm:$0xff]
          %v840 = vld [vmem:[#allocation11 + $0x70] sm:$0xff]
          %v841 = vld [vmem:[#allocation11 + $0x78] sm:$0xff]
          %v842 = vld [vmem:[#allocation11 + $0x80] sm:$0xff]
          %v843 = vld [vmem:[#allocation11 + $0x88] sm:$0xff]
          %v844 = vld [vmem:[#allocation11 + $0x90] sm:$0xff]
          %v845 = vld [vmem:[#allocation11 + $0x98] sm:$0xff]
          %v846 = vld [vmem:[#allocation11 + $0xa0] sm:$0xff]
          %v847 = vld [vmem:[#allocation11 + $0xa8] sm:$0xff]
          %v848 = vld [vmem:[#allocation11 + $0xb0] sm:$0xff]
          %v849 = vld [vmem:[#allocation11 + $0xb8] sm:$0xff]
          %v850 = vld [vmem:[#allocation11 + $0xc0] sm:$0xff]
          %v851 = vld [vmem:[#allocation11 + $0xc8] sm:$0xff]
          %v852 = vld [vmem:[#allocation11 + $0xd0] sm:$0xff]
          %v853 = vld [vmem:[#allocation11 + $0xd8] sm:$0xff]
          %v854 = vld [vmem:[#allocation11 + $0xe0] sm:$0xff]
          %v855 = vld [vmem:[#allocation11 + $0xe8] sm:$0xff]
          %v856 = vld [vmem:[#allocation11 + $0xf0] sm:$0xff]
          %v857 = vld [vmem:[#allocation11 + $0xf8] sm:$0xff]
          %v890 = vunpack.c.l.b16 %v826
          %v891 = vunpack.c.h.b16 %v826
          %v892 = vunpack.c.l.b16 %v827
          %v893 = vunpack.c.h.b16 %v827
          %v894 = vunpack.c.l.b16 %v828
          %v895 = vunpack.c.h.b16 %v828
          %v896 = vunpack.c.l.b16 %v829
          %v897 = vunpack.c.h.b16 %v829
          %v898 = vunpack.c.l.b16 %v830
          %v899 = vunpack.c.h.b16 %v830
          %v900 = vunpack.c.l.b16 %v831
          %v901 = vunpack.c.h.b16 %v831
          %v902 = vunpack.c.l.b16 %v832
          %v903 = vunpack.c.h.b16 %v832
          %v904 = vunpack.c.l.b16 %v833
          %v905 = vunpack.c.h.b16 %v833
          %v906 = vunpack.c.l.b16 %v834
          %v907 = vunpack.c.h.b16 %v834
          %v908 = vunpack.c.l.b16 %v835
          %v909 = vunpack.c.h.b16 %v835
          %v910 = vunpack.c.l.b16 %v836
          %v911 = vunpack.c.h.b16 %v836
          %v912 = vunpack.c.l.b16 %v837
          %v913 = vunpack.c.h.b16 %v837
          %v914 = vunpack.c.l.b16 %v838
          %v915 = vunpack.c.h.b16 %v838
          %v916 = vunpack.c.l.b16 %v839
          %v917 = vunpack.c.h.b16 %v839
          %v918 = vunpack.c.l.b16 %v840
          %v919 = vunpack.c.h.b16 %v840
          %v920 = vunpack.c.l.b16 %v841
          %v921 = vunpack.c.h.b16 %v841
          %v922 = vunpack.c.l.b16 %v842
          %v923 = vunpack.c.h.b16 %v842
          %v924 = vunpack.c.l.b16 %v843
          %v925 = vunpack.c.h.b16 %v843
          %v926 = vunpack.c.l.b16 %v844
          %v927 = vunpack.c.h.b16 %v844
          %v928 = vunpack.c.l.b16 %v845
          %v929 = vunpack.c.h.b16 %v845
          %v930 = vunpack.c.l.b16 %v846
          %v931 = vunpack.c.h.b16 %v846
          %v932 = vunpack.c.l.b16 %v847
          %v933 = vunpack.c.h.b16 %v847
          %v934 = vunpack.c.l.b16 %v848
          %v935 = vunpack.c.h.b16 %v848
          %v936 = vunpack.c.l.b16 %v849
          %v937 = vunpack.c.h.b16 %v849
          %v938 = vunpack.c.l.b16 %v850
          %v939 = vunpack.c.h.b16 %v850
          %v940 = vunpack.c.l.b16 %v851
          %v941 = vunpack.c.h.b16 %v851
          %v942 = vunpack.c.l.b16 %v852
          %v943 = vunpack.c.h.b16 %v852
          %v944 = vunpack.c.l.b16 %v853
          %v945 = vunpack.c.h.b16 %v853
          %v946 = vunpack.c.l.b16 %v854
          %v947 = vunpack.c.h.b16 %v854
          %v948 = vunpack.c.l.b16 %v855
          %v949 = vunpack.c.h.b16 %v855
          %v950 = vunpack.c.l.b16 %v856
          %v951 = vunpack.c.h.b16 %v856
          %v952 = vunpack.c.l.b16 %v857
          %v953 = vunpack.c.h.b16 %v857
          %v954 = vpack.c.b16 %v892, %v890
          %v955 = vpack.c.b16 %v893, %v891
          %v956 = vpack.c.b16 %v896, %v894
          %v957 = vpack.c.b16 %v897, %v895
          %v958 = vpack.c.b16 %v900, %v898
          %v959 = vpack.c.b16 %v901, %v899
          %v960 = vpack.c.b16 %v904, %v902
          %v961 = vpack.c.b16 %v905, %v903
          %v962 = vpack.c.b16 %v908, %v906
          %v963 = vpack.c.b16 %v909, %v907
          %v964 = vpack.c.b16 %v912, %v910
          %v965 = vpack.c.b16 %v913, %v911
          %v966 = vpack.c.b16 %v916, %v914
          %v967 = vpack.c.b16 %v917, %v915
          %v968 = vpack.c.b16 %v920, %v918
          %v969 = vpack.c.b16 %v921, %v919
          %v970 = vpack.c.b16 %v924, %v922
          %v971 = vpack.c.b16 %v925, %v923
          %v972 = vpack.c.b16 %v928, %v926
          %v973 = vpack.c.b16 %v929, %v927
          %v974 = vpack.c.b16 %v932, %v930
          %v975 = vpack.c.b16 %v933, %v931
          %v976 = vpack.c.b16 %v936, %v934
          %v977 = vpack.c.b16 %v937, %v935
          %v978 = vpack.c.b16 %v940, %v938
          %v979 = vpack.c.b16 %v941, %v939
          %v980 = vpack.c.b16 %v944, %v942
          %v981 = vpack.c.b16 %v945, %v943
          %v982 = vpack.c.b16 %v948, %v946
          %v983 = vpack.c.b16 %v949, %v947
          %v984 = vpack.c.b16 %v952, %v950
          %v985 = vpack.c.b16 %v953, %v951
          %1018 = vmatprep.subr.bf16.mxu0 %v969
          %1019 = vmatpush1.bf16.xpose.msra.mxu0 %v968
          %1020 = vmatprep.subr.bf16.mxu0 %v967
          %1021 = vmatpush1.bf16.xpose.msra.mxu0 %v966
          %1022 = vmatprep.subr.bf16.mxu0 %v965
          %1023 = vmatpush1.bf16.xpose.msra.mxu0 %v964
          %1024 = vmatprep.subr.bf16.mxu0 %v963
          %1025 = vmatpush1.bf16.xpose.msra.mxu0 %v962
          %1026 = vmatprep.subr.bf16.mxu0 %v961
          %1027 = vmatpush1.bf16.xpose.msra.mxu0 %v960
          %1028 = vmatprep.subr.bf16.mxu0 %v959
          %1029 = vmatpush1.bf16.xpose.msra.mxu0 %v958
          %1030 = vmatprep.subr.bf16.mxu0 %v957
          %1031 = vmatpush1.bf16.xpose.msra.mxu0 %v956
          %1032 = vmatprep.subr.bf16.mxu0 %v955
          %1033 = vmatpush1.bf16.xpose.msra.mxu0 %v954
          %1034 = vmatprep.subr.bf16.mxu0 %v985
          %1035 = vmatpush2.bf16.xpose.msra.mxu0 %v984
          %1036 = vmatprep.subr.bf16.mxu0 %v983
          %1037 = vmatpush2.bf16.xpose.msra.mxu0 %v982
          %1038 = vmatprep.subr.bf16.mxu0 %v981
          %1039 = vmatpush2.bf16.xpose.msra.mxu0 %v980
          %1040 = vmatprep.subr.bf16.mxu0 %v979
          %1041 = vmatpush2.bf16.xpose.msra.mxu0 %v978
          %1042 = vmatprep.subr.bf16.mxu0 %v977
          %1043 = vmatpush2.bf16.xpose.msra.mxu0 %v976
          %1044 = vmatprep.subr.bf16.mxu0 %v975
          %1045 = vmatpush2.bf16.xpose.msra.mxu0 %v974
          %1046 = vmatprep.subr.bf16.mxu0 %v973
          %1047 = vmatpush2.bf16.xpose.msra.mxu0 %v972
          %1048 = vmatprep.subr.bf16.mxu0 %v971
          %1049 = vmatpush2.bf16.xpose.msra.mxu0 %v970
          %1050 = vmatprep.mubr.bf16.mxu0 %v811
          %1051 = vmatmul.mubr.bf16.gmra.mxu0 %v810
          %v1052 = vpop.f32.mrf.mxu0
          %v1053 = vadd.f32 3.0, %v1052
          %v1054 = vpop.f32.mrf.mxu0
          %v1055 = vadd.f32 3.0, %v1054
          %v1056 = vpop.f32.mrf.mxu0
          %v1057 = vadd.f32 3.0, %v1056
          %v1058 = vpop.f32.mrf.mxu0
          %v1059 = vadd.f32 3.0, %v1058
          %1060 = vmatprep.mubr.bf16.mxu0 %v813
          %1061 = vmatmul.mubr.bf16.gmra.mxu0 %v812
          %v1062 = vpop.f32.mrf.mxu0
          %v1063 = vadd.f32 3.0, %v1062
          %v1064 = vpop.f32.mrf.mxu0
          %v1065 = vadd.f32 3.0, %v1064
          %v1066 = vpop.f32.mrf.mxu0
          %v1067 = vadd.f32 3.0, %v1066
          %v1068 = vpop.f32.mrf.mxu0
          %v1069 = vadd.f32 3.0, %v1068
          %1070 = vmatprep.mubr.bf16.mxu0 %v815
          %1071 = vmatmul.mubr.bf16.gmra.mxu0 %v814
          %v1072 = vpop.f32.mrf.mxu0
          %v1073 = vadd.f32 3.0, %v1072
          %v1074 = vpop.f32.mrf.mxu0
          %v1075 = vadd.f32 3.0, %v1074
          %v1076 = vpop.f32.mrf.mxu0
          %v1077 = vadd.f32 3.0, %v1076
          %v1078 = vpop.f32.mrf.mxu0
          %v1079 = vadd.f32 3.0, %v1078
          %1080 = vmatprep.mubr.bf16.mxu0 %v817
          %1081 = vmatmul.mubr.bf16.gmra.mxu0 %v816
          %v1082 = vpop.f32.mrf.mxu0
          %v1083 = vadd.f32 3.0, %v1082
          %v1084 = vpop.f32.mrf.mxu0
          %v1085 = vadd.f32 3.0, %v1084
          %v1086 = vpop.f32.mrf.mxu0
          %v1087 = vadd.f32 3.0, %v1086
          %v1088 = vpop.f32.mrf.mxu0
          %v1089 = vadd.f32 3.0, %v1088
          %1090 = vmatprep.mubr.bf16.mxu0 %v819
          %1091 = vmatmul.mubr.bf16.gmra.mxu0 %v818
          %v1092 = vpop.f32.mrf.mxu0
          %v1093 = vadd.f32 3.0, %v1092
          %v1094 = vpop.f32.mrf.mxu0
          %v1095 = vadd.f32 3.0, %v1094
          %v1096 = vpop.f32.mrf.mxu0
          %v1097 = vadd.f32 3.0, %v1096
          %v1098 = vpop.f32.mrf.mxu0
          %v1099 = vadd.f32 3.0, %v1098
          %1100 = vmatprep.mubr.bf16.mxu0 %v821
          %1101 = vmatmul.mubr.bf16.gmra.mxu0 %v820
          %v1102 = vpop.f32.mrf.mxu0
          %v1103 = vadd.f32 3.0, %v1102
          %v1104 = vpop.f32.mrf.mxu0
          %v1105 = vadd.f32 3.0, %v1104
          %v1106 = vpop.f32.mrf.mxu0
          %v1107 = vadd.f32 3.0, %v1106
          %v1108 = vpop.f32.mrf.mxu0
          %v1109 = vadd.f32 3.0, %v1108
          %1110 = vmatprep.mubr.bf16.mxu0 %v823
          %1111 = vmatmul.mubr.bf16.gmra.mxu0 %v822
          %v1112 = vpop.f32.mrf.mxu0
          %v1113 = vadd.f32 3.0, %v1112
          %v1114 = vpop.f32.mrf.mxu0
          %v1115 = vadd.f32 3.0, %v1114
          %v1116 = vpop.f32.mrf.mxu0
          %v1117 = vadd.f32 3.0, %v1116
          %v1118 = vpop.f32.mrf.mxu0
          %v1119 = vadd.f32 3.0, %v1118
          %1120 = vmatprep.mubr.bf16.mxu0 %v825
          %1121 = vmatmul.mubr.bf16.gmra.mxu0 %v824
          %v1122 = vpop.f32.mrf.mxu0
          %v1123 = vadd.f32 3.0, %v1122
          %v1124 = vpop.f32.mrf.mxu0
          %v1125 = vadd.f32 3.0, %v1124
          %v1126 = vpop.f32.mrf.mxu0
          %v1127 = vadd.f32 3.0, %v1126
          %v1128 = vpop.f32.mrf.mxu0
          %v1129 = vadd.f32 3.0, %v1128
          %1130 = vdwg.mxu0
          %v1131 = vmul.f32 %v1053, 0.16666667
          %v1132 = vmul.f32 %v1055, 0.16666667
          %v1133 = vmul.f32 %v1057, 0.16666667
          %v1134 = vmul.f32 %v1059, 0.16666667
          %v1135 = vmul.f32 %v1063, 0.16666667
          %v1136 = vmul.f32 %v1065, 0.16666667
          %v1137 = vmul.f32 %v1067, 0.16666667
          %v1138 = vmul.f32 %v1069, 0.16666667
          %v1139 = vmul.f32 %v1073, 0.16666667
          %v1140 = vmul.f32 %v1075, 0.16666667
          %v1141 = vmul.f32 %v1077, 0.16666667
          %v1142 = vmul.f32 %v1079, 0.16666667
          %v1143 = vmul.f32 %v1083, 0.16666667
          %v1144 = vmul.f32 %v1085, 0.16666667
          %v1145 = vmul.f32 %v1087, 0.16666667
          %v1146 = vmul.f32 %v1089, 0.16666667
          %v1147 = vmul.f32 %v1093, 0.16666667
          %v1148 = vmul.f32 %v1095, 0.16666667
          %v1149 = vmul.f32 %v1097, 0.16666667
          %v1150 = vmul.f32 %v1099, 0.16666667
          %v1151 = vmul.f32 %v1103, 0.16666667
          %v1152 = vmul.f32 %v1105, 0.16666667
          %v1153 = vmul.f32 %v1107, 0.16666667
          %v1154 = vmul.f32 %v1109, 0.16666667
          %v1155 = vmul.f32 %v1113, 0.16666667
          %v1156 = vmul.f32 %v1115, 0.16666667
          %v1157 = vmul.f32 %v1117, 0.16666667
          %v1158 = vmul.f32 %v1119, 0.16666667
          %v1159 = vmul.f32 %v1123, 0.16666667
          %v1160 = vmul.f32 %v1125, 0.16666667
          %v1161 = vmul.f32 %v1127, 0.16666667
          %v1162 = vmul.f32 %v1129, 0.16666667
          %v1163 = vmax.f32 %v1131, 0.0
          %v1164 = vmax.f32 %v1132, 0.0
          %v1165 = vmax.f32 %v1133, 0.0
          %v1166 = vmax.f32 %v1134, 0.0
          %v1167 = vmax.f32 %v1135, 0.0
          %v1168 = vmax.f32 %v1136, 0.0
          %v1169 = vmax.f32 %v1137, 0.0
          %v1170 = vmax.f32 %v1138, 0.0
          %v1171 = vmax.f32 %v1139, 0.0
          %v1172 = vmax.f32 %v1140, 0.0
          %v1173 = vmax.f32 %v1141, 0.0
          %v1174 = vmax.f32 %v1142, 0.0
          %v1175 = vmax.f32 %v1143, 0.0
          %v1176 = vmax.f32 %v1144, 0.0
          %v1177 = vmax.f32 %v1145, 0.0
          %v1178 = vmax.f32 %v1146, 0.0
          %v1179 = vmax.f32 %v1147, 0.0
          %v1180 = vmax.f32 %v1148, 0.0
          %v1181 = vmax.f32 %v1149, 0.0
          %v1182 = vmax.f32 %v1150, 0.0
          %v1183 = vmax.f32 %v1151, 0.0
          %v1184 = vmax.f32 %v1152, 0.0
          %v1185 = vmax.f32 %v1153, 0.0
          %v1186 = vmax.f32 %v1154, 0.0
          %v1187 = vmax.f32 %v1155, 0.0
          %v1188 = vmax.f32 %v1156, 0.0
          %v1189 = vmax.f32 %v1157, 0.0
          %v1190 = vmax.f32 %v1158, 0.0
          %v1191 = vmax.f32 %v1159, 0.0
          %v1192 = vmax.f32 %v1160, 0.0
          %v1193 = vmax.f32 %v1161, 0.0
          %v1194 = vmax.f32 %v1162, 0.0
          %v1195 = vmin.f32 %v1163, 1.0
          %v1196 = vmin.f32 %v1164, 1.0
          %v1197 = vmin.f32 %v1165, 1.0
          %v1198 = vmin.f32 %v1166, 1.0
          %v1199 = vmin.f32 %v1167, 1.0
          %v1200 = vmin.f32 %v1168, 1.0
          %v1201 = vmin.f32 %v1169, 1.0
          %v1202 = vmin.f32 %v1170, 1.0
          %v1203 = vmin.f32 %v1171, 1.0
          %v1204 = vmin.f32 %v1172, 1.0
          %v1205 = vmin.f32 %v1173, 1.0
          %v1206 = vmin.f32 %v1174, 1.0
          %v1207 = vmin.f32 %v1175, 1.0
          %v1208 = vmin.f32 %v1176, 1.0
          %v1209 = vmin.f32 %v1177, 1.0
          %v1210 = vmin.f32 %v1178, 1.0
          %v1211 = vmin.f32 %v1179, 1.0
          %v1212 = vmin.f32 %v1180, 1.0
          %v1213 = vmin.f32 %v1181, 1.0
          %v1214 = vmin.f32 %v1182, 1.0
          %v1215 = vmin.f32 %v1183, 1.0
          %v1216 = vmin.f32 %v1184, 1.0
          %v1217 = vmin.f32 %v1185, 1.0
          %v1218 = vmin.f32 %v1186, 1.0
          %v1219 = vmin.f32 %v1187, 1.0
          %v1220 = vmin.f32 %v1188, 1.0
          %v1221 = vmin.f32 %v1189, 1.0
          %v1222 = vmin.f32 %v1190, 1.0
          %v1223 = vmin.f32 %v1191, 1.0
          %v1224 = vmin.f32 %v1192, 1.0
          %v1225 = vmin.f32 %v1193, 1.0
          %v1226 = vmin.f32 %v1194, 1.0
          %1227 = vst [vmem:[#allocation3] sm:$0xff] %v1195
          %1228 = vst [vmem:[#allocation3 + $0x8] sm:$0xff] %v1196
          %1229 = vst [vmem:[#allocation3 + $0x10] sm:$0xff] %v1197
          %1230 = vst [vmem:[#allocation3 + $0x18] sm:$0xff] %v1198
          %1231 = vst [vmem:[#allocation3 + $0x20] sm:$0xff] %v1199
          %1232 = vst [vmem:[#allocation3 + $0x28] sm:$0xff] %v1200
          %1233 = vst [vmem:[#allocation3 + $0x30] sm:$0xff] %v1201
          %1234 = vst [vmem:[#allocation3 + $0x38] sm:$0xff] %v1202
          %1235 = vst [vmem:[#allocation3 + $0x40] sm:$0xff] %v1203
          %1236 = vst [vmem:[#allocation3 + $0x48] sm:$0xff] %v1204
          %1237 = vst [vmem:[#allocation3 + $0x50] sm:$0xff] %v1205
          %1238 = vst [vmem:[#allocation3 + $0x58] sm:$0xff] %v1206
          %1239 = vst [vmem:[#allocation3 + $0x60] sm:$0xff] %v1207
          %1240 = vst [vmem:[#allocation3 + $0x68] sm:$0xff] %v1208
          %1241 = vst [vmem:[#allocation3 + $0x70] sm:$0xff] %v1209
          %1242 = vst [vmem:[#allocation3 + $0x78] sm:$0xff] %v1210
          %1243 = vst [vmem:[#allocation3 + $0x80] sm:$0xff] %v1211
          %1244 = vst [vmem:[#allocation3 + $0x88] sm:$0xff] %v1212
          %1245 = vst [vmem:[#allocation3 + $0x90] sm:$0xff] %v1213
          %1246 = vst [vmem:[#allocation3 + $0x98] sm:$0xff] %v1214
          %1247 = vst [vmem:[#allocation3 + $0xa0] sm:$0xff] %v1215
          %1248 = vst [vmem:[#allocation3 + $0xa8] sm:$0xff] %v1216
          %1249 = vst [vmem:[#allocation3 + $0xb0] sm:$0xff] %v1217
          %1250 = vst [vmem:[#allocation3 + $0xb8] sm:$0xff] %v1218
          %1251 = vst [vmem:[#allocation3 + $0xc0] sm:$0xff] %v1219
          %1252 = vst [vmem:[#allocation3 + $0xc8] sm:$0xff] %v1220
          %1253 = vst [vmem:[#allocation3 + $0xd0] sm:$0xff] %v1221
          %1254 = vst [vmem:[#allocation3 + $0xd8] sm:$0xff] %v1222
          %1255 = vst [vmem:[#allocation3 + $0xe0] sm:$0xff] %v1223
          %1256 = vst [vmem:[#allocation3 + $0xe8] sm:$0xff] %v1224
          %1257 = vst [vmem:[#allocation3 + $0xf0] sm:$0xff] %v1225
          %1258 = vst [vmem:[#allocation3 + $0xf8] sm:$0xff] %v1226
          %1259 = vst [vmem:[#allocation4] sm:$0xff] 0.0
          %1260 = vst [vmem:[#allocation4 + $0x8] sm:$0xff] 0.0
          %1261 = vst [vmem:[#allocation4 + $0x10] sm:$0xff] 0.0
          %1262 = vst [vmem:[#allocation4 + $0x18] sm:$0xff] 0.0
          %1263 = vst [vmem:[#allocation4 + $0x20] sm:$0xff] 0.0
          %1264 = vst [vmem:[#allocation4 + $0x28] sm:$0xff] 0.0
          %1265 = vst [vmem:[#allocation4 + $0x30] sm:$0xff] 0.0
          %1266 = vst [vmem:[#allocation4 + $0x38] sm:$0xff] 0.0
          %1267 = vst [vmem:[#allocation4 + $0x40] sm:$0xff] 0.0
          %1268 = vst [vmem:[#allocation4 + $0x48] sm:$0xff] 0.0
          %1269 = vst [vmem:[#allocation4 + $0x50] sm:$0xff] 0.0
          %1270 = vst [vmem:[#allocation4 + $0x58] sm:$0xff] 0.0
          %1271 = vst [vmem:[#allocation4 + $0x60] sm:$0xff] 0.0
          %1272 = vst [vmem:[#allocation4 + $0x68] sm:$0xff] 0.0
          %1273 = vst [vmem:[#allocation4 + $0x70] sm:$0xff] 0.0
          %1274 = vst [vmem:[#allocation4 + $0x78] sm:$0xff] 0.0
          %1275 = vst [vmem:[#allocation4 + $0x80] sm:$0xff] 0.0
          %1276 = vst [vmem:[#allocation4 + $0x88] sm:$0xff] 0.0
          %1277 = vst [vmem:[#allocation4 + $0x90] sm:$0xff] 0.0
          %1278 = vst [vmem:[#allocation4 + $0x98] sm:$0xff] 0.0
          %1279 = vst [vmem:[#allocation4 + $0xa0] sm:$0xff] 0.0
          %1280 = vst [vmem:[#allocation4 + $0xa8] sm:$0xff] 0.0
          %1281 = vst [vmem:[#allocation4 + $0xb0] sm:$0xff] 0.0
          %1282 = vst [vmem:[#allocation4 + $0xb8] sm:$0xff] 0.0
          %1283 = vst [vmem:[#allocation4 + $0xc0] sm:$0xff] 0.0
          %1284 = vst [vmem:[#allocation4 + $0xc8] sm:$0xff] 0.0
          %1285 = vst [vmem:[#allocation4 + $0xd0] sm:$0xff] 0.0
          %1286 = vst [vmem:[#allocation4 + $0xd8] sm:$0xff] 0.0
          %1287 = vst [vmem:[#allocation4 + $0xe0] sm:$0xff] 0.0
          %1288 = vst [vmem:[#allocation4 + $0xe8] sm:$0xff] 0.0
          %1289 = vst [vmem:[#allocation4 + $0xf0] sm:$0xff] 0.0
          %1290 = vst [vmem:[#allocation4 + $0xf8] sm:$0xff] 0.0
        $region72: #{tpu_custom_call.1} parent=47 // pred_fallthru
          _
        %v1291 = vld [vmem:[#allocation2] sm:$0xff]
        %v1292 = vld [vmem:[#allocation2 + $0x8] sm:$0xff]
        %v1293 = vld [vmem:[#allocation2 + $0x10] sm:$0xff]
        %v1294 = vld [vmem:[#allocation2 + $0x18] sm:$0xff]
        %v1295 = vld [vmem:[#allocation2 + $0x20] sm:$0xff]
        %v1296 = vld [vmem:[#allocation2 + $0x28] sm:$0xff]
        %v1297 = vld [vmem:[#allocation2 + $0x30] sm:$0xff]
        %v1298 = vld [vmem:[#allocation2 + $0x38] sm:$0xff]
        %v1299 = vld [vmem:[#allocation2 + $0x40] sm:$0xff]
        %v1300 = vld [vmem:[#allocation2 + $0x48] sm:$0xff]
        %v1301 = vld [vmem:[#allocation2 + $0x50] sm:$0xff]
        %v1302 = vld [vmem:[#allocation2 + $0x58] sm:$0xff]
        %v1303 = vld [vmem:[#allocation2 + $0x60] sm:$0xff]
        %v1304 = vld [vmem:[#allocation2 + $0x68] sm:$0xff]
        %v1305 = vld [vmem:[#allocation2 + $0x70] sm:$0xff]
        %v1306 = vld [vmem:[#allocation2 + $0x78] sm:$0xff]
        %v1307 = vld [vmem:[%s382] sm:$0xff]
        %v1308 = vld [vmem:[%s382 + $0x8] sm:$0xff]
        %v1309 = vld [vmem:[%s382 + $0x10] sm:$0xff]
        %v1310 = vld [vmem:[%s382 + $0x18] sm:$0xff]
        %v1311 = vld [vmem:[%s382 + $0x20] sm:$0xff]
        %v1312 = vld [vmem:[%s382 + $0x28] sm:$0xff]
        %v1313 = vld [vmem:[%s382 + $0x30] sm:$0xff]
        %v1314 = vld [vmem:[%s382 + $0x38] sm:$0xff]
        %v1315 = vld [vmem:[%s382 + $0x40] sm:$0xff]
        %v1316 = vld [vmem:[%s382 + $0x48] sm:$0xff]
        %v1317 = vld [vmem:[%s382 + $0x50] sm:$0xff]
        %v1318 = vld [vmem:[%s382 + $0x58] sm:$0xff]
        %v1319 = vld [vmem:[%s382 + $0x60] sm:$0xff]
        %v1320 = vld [vmem:[%s382 + $0x68] sm:$0xff]
        %v1321 = vld [vmem:[%s382 + $0x70] sm:$0xff]
        %v1322 = vld [vmem:[%s382 + $0x78] sm:$0xff]
        %v1323 = vld [vmem:[%s382 + $0x80] sm:$0xff]
        %v1324 = vld [vmem:[%s382 + $0x88] sm:$0xff]
        %v1325 = vld [vmem:[%s382 + $0x90] sm:$0xff]
        %v1326 = vld [vmem:[%s382 + $0x98] sm:$0xff]
        %v1327 = vld [vmem:[%s382 + $0xa0] sm:$0xff]
        %v1328 = vld [vmem:[%s382 + $0xa8] sm:$0xff]
        %v1329 = vld [vmem:[%s382 + $0xb0] sm:$0xff]
        %v1330 = vld [vmem:[%s382 + $0xb8] sm:$0xff]
        %v1331 = vld [vmem:[%s382 + $0xc0] sm:$0xff]
        %v1332 = vld [vmem:[%s382 + $0xc8] sm:$0xff]
        %v1333 = vld [vmem:[%s382 + $0xd0] sm:$0xff]
        %v1334 = vld [vmem:[%s382 + $0xd8] sm:$0xff]
        %v1335 = vld [vmem:[%s382 + $0xe0] sm:$0xff]
        %v1336 = vld [vmem:[%s382 + $0xe8] sm:$0xff]
        %v1337 = vld [vmem:[%s382 + $0xf0] sm:$0xff]
        %v1338 = vld [vmem:[%s382 + $0xf8] sm:$0xff]
        %v1339 = vld [vmem:[%s382 + $0x100] sm:$0xff]
        %v1340 = vld [vmem:[%s382 + $0x108] sm:$0xff]
        %v1341 = vld [vmem:[%s382 + $0x110] sm:$0xff]
        %v1342 = vld [vmem:[%s382 + $0x118] sm:$0xff]
        %v1343 = vld [vmem:[%s382 + $0x120] sm:$0xff]
        %v1344 = vld [vmem:[%s382 + $0x128] sm:$0xff]
        %v1345 = vld [vmem:[%s382 + $0x130] sm:$0xff]
        %v1346 = vld [vmem:[%s382 + $0x138] sm:$0xff]
        %v1347 = vld [vmem:[%s382 + $0x140] sm:$0xff]
        %v1348 = vld [vmem:[%s382 + $0x148] sm:$0xff]
        %v1349 = vld [vmem:[%s382 + $0x150] sm:$0xff]
        %v1350 = vld [vmem:[%s382 + $0x158] sm:$0xff]
        %v1351 = vld [vmem:[%s382 + $0x160] sm:$0xff]
        %v1352 = vld [vmem:[%s382 + $0x168] sm:$0xff]
        %v1353 = vld [vmem:[%s382 + $0x170] sm:$0xff]
        %v1354 = vld [vmem:[%s382 + $0x178] sm:$0xff]
        %v1355 = vld [vmem:[%s382 + $0x180] sm:$0xff]
        %v1356 = vld [vmem:[%s382 + $0x188] sm:$0xff]
        %v1357 = vld [vmem:[%s382 + $0x190] sm:$0xff]
        %v1358 = vld [vmem:[%s382 + $0x198] sm:$0xff]
        %v1359 = vld [vmem:[%s382 + $0x1a0] sm:$0xff]
        %v1360 = vld [vmem:[%s382 + $0x1a8] sm:$0xff]
        %v1361 = vld [vmem:[%s382 + $0x1b0] sm:$0xff]
        %v1362 = vld [vmem:[%s382 + $0x1b8] sm:$0xff]
        %v1363 = vld [vmem:[%s382 + $0x1c0] sm:$0xff]
        %v1364 = vld [vmem:[%s382 + $0x1c8] sm:$0xff]
        %v1365 = vld [vmem:[%s382 + $0x1d0] sm:$0xff]
        %v1366 = vld [vmem:[%s382 + $0x1d8] sm:$0xff]
        %v1367 = vld [vmem:[%s382 + $0x1e0] sm:$0xff]
        %v1368 = vld [vmem:[%s382 + $0x1e8] sm:$0xff]
        %v1369 = vld [vmem:[%s382 + $0x1f0] sm:$0xff]
        %v1370 = vld [vmem:[%s382 + $0x1f8] sm:$0xff]
        %v1387 = vunpack.c.l.b16 %v1291
        %v1388 = vunpack.c.h.b16 %v1291
        %v1389 = vunpack.c.l.b16 %v1292
        %v1390 = vunpack.c.h.b16 %v1292
        %v1391 = vunpack.c.l.b16 %v1293
        %v1392 = vunpack.c.h.b16 %v1293
        %v1393 = vunpack.c.l.b16 %v1294
        %v1394 = vunpack.c.h.b16 %v1294
        %v1395 = vunpack.c.l.b16 %v1295
        %v1396 = vunpack.c.h.b16 %v1295
        %v1397 = vunpack.c.l.b16 %v1296
        %v1398 = vunpack.c.h.b16 %v1296
        %v1399 = vunpack.c.l.b16 %v1297
        %v1400 = vunpack.c.h.b16 %v1297
        %v1401 = vunpack.c.l.b16 %v1298
        %v1402 = vunpack.c.h.b16 %v1298
        %v1403 = vunpack.c.l.b16 %v1299
        %v1404 = vunpack.c.h.b16 %v1299
        %v1405 = vunpack.c.l.b16 %v1300
        %v1406 = vunpack.c.h.b16 %v1300
        %v1407 = vunpack.c.l.b16 %v1301
        %v1408 = vunpack.c.h.b16 %v1301
        %v1409 = vunpack.c.l.b16 %v1302
        %v1410 = vunpack.c.h.b16 %v1302
        %v1411 = vunpack.c.l.b16 %v1303
        %v1412 = vunpack.c.h.b16 %v1303
        %v1413 = vunpack.c.l.b16 %v1304
        %v1414 = vunpack.c.h.b16 %v1304
        %v1415 = vunpack.c.l.b16 %v1305
        %v1416 = vunpack.c.h.b16 %v1305
        %v1417 = vunpack.c.l.b16 %v1306
        %v1418 = vunpack.c.h.b16 %v1306
        %v1419 = vpack.c.b16 %v1389, %v1387
        %v1420 = vpack.c.b16 %v1390, %v1388
        %v1421 = vpack.c.b16 %v1393, %v1391
        %v1422 = vpack.c.b16 %v1394, %v1392
        %v1423 = vpack.c.b16 %v1397, %v1395
        %v1424 = vpack.c.b16 %v1398, %v1396
        %v1425 = vpack.c.b16 %v1401, %v1399
        %v1426 = vpack.c.b16 %v1402, %v1400
        %v1427 = vpack.c.b16 %v1405, %v1403
        %v1428 = vpack.c.b16 %v1406, %v1404
        %v1429 = vpack.c.b16 %v1409, %v1407
        %v1430 = vpack.c.b16 %v1410, %v1408
        %v1431 = vpack.c.b16 %v1413, %v1411
        %v1432 = vpack.c.b16 %v1414, %v1412
        %v1433 = vpack.c.b16 %v1417, %v1415
        %v1434 = vpack.c.b16 %v1418, %v1416
        %v1515 = vunpack.c.l.b16 %v1307
        %v1516 = vunpack.c.h.b16 %v1307
        %v1517 = vunpack.c.l.b16 %v1308
        %v1518 = vunpack.c.h.b16 %v1308
        %v1519 = vunpack.c.l.b16 %v1309
        %v1520 = vunpack.c.h.b16 %v1309
        %v1521 = vunpack.c.l.b16 %v1310
        %v1522 = vunpack.c.h.b16 %v1310
        %v1523 = vunpack.c.l.b16 %v1311
        %v1524 = vunpack.c.h.b16 %v1311
        %v1525 = vunpack.c.l.b16 %v1312
        %v1526 = vunpack.c.h.b16 %v1312
        %v1527 = vunpack.c.l.b16 %v1313
        %v1528 = vunpack.c.h.b16 %v1313
        %v1529 = vunpack.c.l.b16 %v1314
        %v1530 = vunpack.c.h.b16 %v1314
        %v1531 = vunpack.c.l.b16 %v1315
        %v1532 = vunpack.c.h.b16 %v1315
        %v1533 = vunpack.c.l.b16 %v1316
        %v1534 = vunpack.c.h.b16 %v1316
        %v1535 = vunpack.c.l.b16 %v1317
        %v1536 = vunpack.c.h.b16 %v1317
        %v1537 = vunpack.c.l.b16 %v1318
        %v1538 = vunpack.c.h.b16 %v1318
        %v1539 = vunpack.c.l.b16 %v1319
        %v1540 = vunpack.c.h.b16 %v1319
        %v1541 = vunpack.c.l.b16 %v1320
        %v1542 = vunpack.c.h.b16 %v1320
        %v1543 = vunpack.c.l.b16 %v1321
        %v1544 = vunpack.c.h.b16 %v1321
        %v1545 = vunpack.c.l.b16 %v1322
        %v1546 = vunpack.c.h.b16 %v1322
        %v1547 = vunpack.c.l.b16 %v1323
        %v1548 = vunpack.c.h.b16 %v1323
        %v1549 = vunpack.c.l.b16 %v1324
        %v1550 = vunpack.c.h.b16 %v1324
        %v1551 = vunpack.c.l.b16 %v1325
        %v1552 = vunpack.c.h.b16 %v1325
        %v1553 = vunpack.c.l.b16 %v1326
        %v1554 = vunpack.c.h.b16 %v1326
        %v1555 = vunpack.c.l.b16 %v1327
        %v1556 = vunpack.c.h.b16 %v1327
        %v1557 = vunpack.c.l.b16 %v1328
        %v1558 = vunpack.c.h.b16 %v1328
        %v1559 = vunpack.c.l.b16 %v1329
        %v1560 = vunpack.c.h.b16 %v1329
        %v1561 = vunpack.c.l.b16 %v1330
        %v1562 = vunpack.c.h.b16 %v1330
        %v1563 = vunpack.c.l.b16 %v1331
        %v1564 = vunpack.c.h.b16 %v1331
        %v1565 = vunpack.c.l.b16 %v1332
        %v1566 = vunpack.c.h.b16 %v1332
        %v1567 = vunpack.c.l.b16 %v1333
        %v1568 = vunpack.c.h.b16 %v1333
        %v1569 = vunpack.c.l.b16 %v1334
        %v1570 = vunpack.c.h.b16 %v1334
        %v1571 = vunpack.c.l.b16 %v1335
        %v1572 = vunpack.c.h.b16 %v1335
        %v1573 = vunpack.c.l.b16 %v1336
        %v1574 = vunpack.c.h.b16 %v1336
        %v1575 = vunpack.c.l.b16 %v1337
        %v1576 = vunpack.c.h.b16 %v1337
        %v1577 = vunpack.c.l.b16 %v1338
        %v1578 = vunpack.c.h.b16 %v1338
        %v1579 = vunpack.c.l.b16 %v1339
        %v1580 = vunpack.c.h.b16 %v1339
        %v1581 = vunpack.c.l.b16 %v1340
        %v1582 = vunpack.c.h.b16 %v1340
        %v1583 = vunpack.c.l.b16 %v1341
        %v1584 = vunpack.c.h.b16 %v1341
        %v1585 = vunpack.c.l.b16 %v1342
        %v1586 = vunpack.c.h.b16 %v1342
        %v1587 = vunpack.c.l.b16 %v1343
        %v1588 = vunpack.c.h.b16 %v1343
        %v1589 = vunpack.c.l.b16 %v1344
        %v1590 = vunpack.c.h.b16 %v1344
        %v1591 = vunpack.c.l.b16 %v1345
        %v1592 = vunpack.c.h.b16 %v1345
        %v1593 = vunpack.c.l.b16 %v1346
        %v1594 = vunpack.c.h.b16 %v1346
        %v1595 = vunpack.c.l.b16 %v1347
        %v1596 = vunpack.c.h.b16 %v1347
        %v1597 = vunpack.c.l.b16 %v1348
        %v1598 = vunpack.c.h.b16 %v1348
        %v1599 = vunpack.c.l.b16 %v1349
        %v1600 = vunpack.c.h.b16 %v1349
        %v1601 = vunpack.c.l.b16 %v1350
        %v1602 = vunpack.c.h.b16 %v1350
        %v1603 = vunpack.c.l.b16 %v1351
        %v1604 = vunpack.c.h.b16 %v1351
        %v1605 = vunpack.c.l.b16 %v1352
        %v1606 = vunpack.c.h.b16 %v1352
        %v1607 = vunpack.c.l.b16 %v1353
        %v1608 = vunpack.c.h.b16 %v1353
        %v1609 = vunpack.c.l.b16 %v1354
        %v1610 = vunpack.c.h.b16 %v1354
        %v1611 = vunpack.c.l.b16 %v1355
        %v1612 = vunpack.c.h.b16 %v1355
        %v1613 = vunpack.c.l.b16 %v1356
        %v1614 = vunpack.c.h.b16 %v1356
        %v1615 = vunpack.c.l.b16 %v1357
        %v1616 = vunpack.c.h.b16 %v1357
        %v1617 = vunpack.c.l.b16 %v1358
        %v1618 = vunpack.c.h.b16 %v1358
        %v1619 = vunpack.c.l.b16 %v1359
        %v1620 = vunpack.c.h.b16 %v1359
        %v1621 = vunpack.c.l.b16 %v1360
        %v1622 = vunpack.c.h.b16 %v1360
        %v1623 = vunpack.c.l.b16 %v1361
        %v1624 = vunpack.c.h.b16 %v1361
        %v1625 = vunpack.c.l.b16 %v1362
        %v1626 = vunpack.c.h.b16 %v1362
        %v1627 = vunpack.c.l.b16 %v1363
        %v1628 = vunpack.c.h.b16 %v1363
        %v1629 = vunpack.c.l.b16 %v1364
        %v1630 = vunpack.c.h.b16 %v1364
        %v1631 = vunpack.c.l.b16 %v1365
        %v1632 = vunpack.c.h.b16 %v1365
        %v1633 = vunpack.c.l.b16 %v1366
        %v1634 = vunpack.c.h.b16 %v1366
        %v1635 = vunpack.c.l.b16 %v1367
        %v1636 = vunpack.c.h.b16 %v1367
        %v1637 = vunpack.c.l.b16 %v1368
        %v1638 = vunpack.c.h.b16 %v1368
        %v1639 = vunpack.c.l.b16 %v1369
        %v1640 = vunpack.c.h.b16 %v1369
        %v1641 = vunpack.c.l.b16 %v1370
        %v1642 = vunpack.c.h.b16 %v1370
        %v1643 = vpack.c.b16 %v1517, %v1515
        %v1644 = vpack.c.b16 %v1518, %v1516
        %v1645 = vpack.c.b16 %v1521, %v1519
        %v1646 = vpack.c.b16 %v1522, %v1520
        %v1647 = vpack.c.b16 %v1525, %v1523
        %v1648 = vpack.c.b16 %v1526, %v1524
        %v1649 = vpack.c.b16 %v1529, %v1527
        %v1650 = vpack.c.b16 %v1530, %v1528
        %v1651 = vpack.c.b16 %v1533, %v1531
        %v1652 = vpack.c.b16 %v1534, %v1532
        %v1653 = vpack.c.b16 %v1537, %v1535
        %v1654 = vpack.c.b16 %v1538, %v1536
        %v1655 = vpack.c.b16 %v1541, %v1539
        %v1656 = vpack.c.b16 %v1542, %v1540
        %v1657 = vpack.c.b16 %v1545, %v1543
        %v1658 = vpack.c.b16 %v1546, %v1544
        %v1659 = vpack.c.b16 %v1549, %v1547
        %v1660 = vpack.c.b16 %v1550, %v1548
        %v1661 = vpack.c.b16 %v1553, %v1551
        %v1662 = vpack.c.b16 %v1554, %v1552
        %v1663 = vpack.c.b16 %v1557, %v1555
        %v1664 = vpack.c.b16 %v1558, %v1556
        %v1665 = vpack.c.b16 %v1561, %v1559
        %v1666 = vpack.c.b16 %v1562, %v1560
        %v1667 = vpack.c.b16 %v1565, %v1563
        %v1668 = vpack.c.b16 %v1566, %v1564
        %v1669 = vpack.c.b16 %v1569, %v1567
        %v1670 = vpack.c.b16 %v1570, %v1568
        %v1671 = vpack.c.b16 %v1573, %v1571
        %v1672 = vpack.c.b16 %v1574, %v1572
        %v1673 = vpack.c.b16 %v1577, %v1575
        %v1674 = vpack.c.b16 %v1578, %v1576
        %v1675 = vpack.c.b16 %v1581, %v1579
        %v1676 = vpack.c.b16 %v1582, %v1580
        %v1677 = vpack.c.b16 %v1585, %v1583
        %v1678 = vpack.c.b16 %v1586, %v1584
        %v1679 = vpack.c.b16 %v1589, %v1587
        %v1680 = vpack.c.b16 %v1590, %v1588
        %v1681 = vpack.c.b16 %v1593, %v1591
        %v1682 = vpack.c.b16 %v1594, %v1592
        %v1683 = vpack.c.b16 %v1597, %v1595
        %v1684 = vpack.c.b16 %v1598, %v1596
        %v1685 = vpack.c.b16 %v1601, %v1599
        %v1686 = vpack.c.b16 %v1602, %v1600
        %v1687 = vpack.c.b16 %v1605, %v1603
        %v1688 = vpack.c.b16 %v1606, %v1604
        %v1689 = vpack.c.b16 %v1609, %v1607
        %v1690 = vpack.c.b16 %v1610, %v1608
        %v1691 = vpack.c.b16 %v1613, %v1611
        %v1692 = vpack.c.b16 %v1614, %v1612
        %v1693 = vpack.c.b16 %v1617, %v1615
        %v1694 = vpack.c.b16 %v1618, %v1616
        %v1695 = vpack.c.b16 %v1621, %v1619
        %v1696 = vpack.c.b16 %v1622, %v1620
        %v1697 = vpack.c.b16 %v1625, %v1623
        %v1698 = vpack.c.b16 %v1626, %v1624
        %v1699 = vpack.c.b16 %v1629, %v1627
        %v1700 = vpack.c.b16 %v1630, %v1628
        %v1701 = vpack.c.b16 %v1633, %v1631
        %v1702 = vpack.c.b16 %v1634, %v1632
        %v1703 = vpack.c.b16 %v1637, %v1635
        %v1704 = vpack.c.b16 %v1638, %v1636
        %v1705 = vpack.c.b16 %v1641, %v1639
        %v1706 = vpack.c.b16 %v1642, %v1640
        %1771 = vmatprep.subr.bf16.mxu0 %v1658
        %1772 = vmatpush1.bf16.xpose.msra.mxu0 %v1657
        %1773 = vmatprep.subr.bf16.mxu0 %v1656
        %1774 = vmatpush1.bf16.xpose.msra.mxu0 %v1655
        %1775 = vmatprep.subr.bf16.mxu0 %v1654
        %1776 = vmatpush1.bf16.xpose.msra.mxu0 %v1653
        %1777 = vmatprep.subr.bf16.mxu0 %v1652
        %1778 = vmatpush1.bf16.xpose.msra.mxu0 %v1651
        %1779 = vmatprep.subr.bf16.mxu0 %v1650
        %1780 = vmatpush1.bf16.xpose.msra.mxu0 %v1649
        %1781 = vmatprep.subr.bf16.mxu0 %v1648
        %1782 = vmatpush1.bf16.xpose.msra.mxu0 %v1647
        %1783 = vmatprep.subr.bf16.mxu0 %v1646
        %1784 = vmatpush1.bf16.xpose.msra.mxu0 %v1645
        %1785 = vmatprep.subr.bf16.mxu0 %v1644
        %1786 = vmatpush1.bf16.xpose.msra.mxu0 %v1643
        %1787 = vmatprep.subr.bf16.mxu0 %v1674
        %1788 = vmatpush2.bf16.xpose.msra.mxu0 %v1673
        %1789 = vmatprep.subr.bf16.mxu0 %v1672
        %1790 = vmatpush2.bf16.xpose.msra.mxu0 %v1671
        %1791 = vmatprep.subr.bf16.mxu0 %v1670
        %1792 = vmatpush2.bf16.xpose.msra.mxu0 %v1669
        %1793 = vmatprep.subr.bf16.mxu0 %v1668
        %1794 = vmatpush2.bf16.xpose.msra.mxu0 %v1667
        %1795 = vmatprep.subr.bf16.mxu0 %v1666
        %1796 = vmatpush2.bf16.xpose.msra.mxu0 %v1665
        %1797 = vmatprep.subr.bf16.mxu0 %v1664
        %1798 = vmatpush2.bf16.xpose.msra.mxu0 %v1663
        %1799 = vmatprep.subr.bf16.mxu0 %v1662
        %1800 = vmatpush2.bf16.xpose.msra.mxu0 %v1661
        %1801 = vmatprep.subr.bf16.mxu0 %v1660
        %1802 = vmatpush2.bf16.xpose.msra.mxu0 %v1659
        %1803 = vmatprep.mubr.bf16.mxu0 %v1420
        %1804 = vmatmul.mubr.bf16.gmra.mxu0 %v1419
        %v1805 = vpop.f32.mrf.mxu0
        %v1806 = vadd.f32 0.0, %v1805
        %v1807 = vpop.f32.mrf.mxu0
        %v1808 = vadd.f32 0.0, %v1807
        %v1809 = vpop.f32.mrf.mxu0
        %v1810 = vadd.f32 0.0, %v1809
        %v1811 = vpop.f32.mrf.mxu0
        %v1812 = vadd.f32 0.0, %v1811
        %1813 = vmatprep.mubr.bf16.mxu0 %v1422
        %1814 = vmatmul.mubr.bf16.gmra.mxu0 %v1421
        %v1815 = vpop.f32.mrf.mxu0
        %v1816 = vadd.f32 0.0, %v1815
        %v1817 = vpop.f32.mrf.mxu0
        %v1818 = vadd.f32 0.0, %v1817
        %v1819 = vpop.f32.mrf.mxu0
        %v1820 = vadd.f32 0.0, %v1819
        %v1821 = vpop.f32.mrf.mxu0
        %v1822 = vadd.f32 0.0, %v1821
        %1823 = vmatprep.mubr.bf16.mxu0 %v1424
        %1824 = vmatmul.mubr.bf16.gmra.mxu0 %v1423
        %v1825 = vpop.f32.mrf.mxu0
        %v1826 = vadd.f32 0.0, %v1825
        %v1827 = vpop.f32.mrf.mxu0
        %v1828 = vadd.f32 0.0, %v1827
        %v1829 = vpop.f32.mrf.mxu0
        %v1830 = vadd.f32 0.0, %v1829
        %v1831 = vpop.f32.mrf.mxu0
        %v1832 = vadd.f32 0.0, %v1831
        %1833 = vmatprep.mubr.bf16.mxu0 %v1426
        %1834 = vmatmul.mubr.bf16.gmra.mxu0 %v1425
        %v1835 = vpop.f32.mrf.mxu0
        %v1836 = vadd.f32 0.0, %v1835
        %v1837 = vpop.f32.mrf.mxu0
        %v1838 = vadd.f32 0.0, %v1837
        %v1839 = vpop.f32.mrf.mxu0
        %v1840 = vadd.f32 0.0, %v1839
        %v1841 = vpop.f32.mrf.mxu0
        %v1842 = vadd.f32 0.0, %v1841
        %1843 = vmatprep.mubr.bf16.mxu0 %v1428
        %1844 = vmatmul.mubr.bf16.gmra.mxu0 %v1427
        %v1845 = vpop.f32.mrf.mxu0
        %v1846 = vadd.f32 0.0, %v1845
        %v1847 = vpop.f32.mrf.mxu0
        %v1848 = vadd.f32 0.0, %v1847
        %v1849 = vpop.f32.mrf.mxu0
        %v1850 = vadd.f32 0.0, %v1849
        %v1851 = vpop.f32.mrf.mxu0
        %v1852 = vadd.f32 0.0, %v1851
        %1853 = vmatprep.mubr.bf16.mxu0 %v1430
        %1854 = vmatmul.mubr.bf16.gmra.mxu0 %v1429
        %v1855 = vpop.f32.mrf.mxu0
        %v1856 = vadd.f32 0.0, %v1855
        %v1857 = vpop.f32.mrf.mxu0
        %v1858 = vadd.f32 0.0, %v1857
        %v1859 = vpop.f32.mrf.mxu0
        %v1860 = vadd.f32 0.0, %v1859
        %v1861 = vpop.f32.mrf.mxu0
        %v1862 = vadd.f32 0.0, %v1861
        %1863 = vmatprep.mubr.bf16.mxu0 %v1432
        %1864 = vmatmul.mubr.bf16.gmra.mxu0 %v1431
        %v1865 = vpop.f32.mrf.mxu0
        %v1866 = vadd.f32 0.0, %v1865
        %v1867 = vpop.f32.mrf.mxu0
        %v1868 = vadd.f32 0.0, %v1867
        %v1869 = vpop.f32.mrf.mxu0
        %v1870 = vadd.f32 0.0, %v1869
        %v1871 = vpop.f32.mrf.mxu0
        %v1872 = vadd.f32 0.0, %v1871
        %1873 = vmatprep.mubr.bf16.mxu0 %v1434
        %1874 = vmatmul.mubr.bf16.gmra.mxu0 %v1433
        %v1875 = vpop.f32.mrf.mxu0
        %v1876 = vadd.f32 0.0, %v1875
        %v1877 = vpop.f32.mrf.mxu0
        %v1878 = vadd.f32 0.0, %v1877
        %v1879 = vpop.f32.mrf.mxu0
        %v1880 = vadd.f32 0.0, %v1879
        %v1881 = vpop.f32.mrf.mxu0
        %v1882 = vadd.f32 0.0, %v1881
        %1883 = vdwg.mxu0
        %1884 = vmatprep.subr.bf16.mxu0 %v1690
        %1885 = vmatpush1.bf16.xpose.msra.mxu0 %v1689
        %1886 = vmatprep.subr.bf16.mxu0 %v1688
        %1887 = vmatpush1.bf16.xpose.msra.mxu0 %v1687
        %1888 = vmatprep.subr.bf16.mxu0 %v1686
        %1889 = vmatpush1.bf16.xpose.msra.mxu0 %v1685
        %1890 = vmatprep.subr.bf16.mxu0 %v1684
        %1891 = vmatpush1.bf16.xpose.msra.mxu0 %v1683
        %1892 = vmatprep.subr.bf16.mxu0 %v1682
        %1893 = vmatpush1.bf16.xpose.msra.mxu0 %v1681
        %1894 = vmatprep.subr.bf16.mxu0 %v1680
        %1895 = vmatpush1.bf16.xpose.msra.mxu0 %v1679
        %1896 = vmatprep.subr.bf16.mxu0 %v1678
        %1897 = vmatpush1.bf16.xpose.msra.mxu0 %v1677
        %1898 = vmatprep.subr.bf16.mxu0 %v1676
        %1899 = vmatpush1.bf16.xpose.msra.mxu0 %v1675
        %1900 = vmatprep.subr.bf16.mxu0 %v1706
        %1901 = vmatpush2.bf16.xpose.msra.mxu0 %v1705
        %1902 = vmatprep.subr.bf16.mxu0 %v1704
        %1903 = vmatpush2.bf16.xpose.msra.mxu0 %v1703
        %1904 = vmatprep.subr.bf16.mxu0 %v1702
        %1905 = vmatpush2.bf16.xpose.msra.mxu0 %v1701
        %1906 = vmatprep.subr.bf16.mxu0 %v1700
        %1907 = vmatpush2.bf16.xpose.msra.mxu0 %v1699
        %1908 = vmatprep.subr.bf16.mxu0 %v1698
        %1909 = vmatpush2.bf16.xpose.msra.mxu0 %v1697
        %1910 = vmatprep.subr.bf16.mxu0 %v1696
        %1911 = vmatpush2.bf16.xpose.msra.mxu0 %v1695
        %1912 = vmatprep.subr.bf16.mxu0 %v1694
        %1913 = vmatpush2.bf16.xpose.msra.mxu0 %v1693
        %1914 = vmatprep.subr.bf16.mxu0 %v1692
        %1915 = vmatpush2.bf16.xpose.msra.mxu0 %v1691
        %1916 = vmatprep.mubr.bf16.mxu0 %v1420
        %1917 = vmatmul.mubr.bf16.gmra.mxu0 %v1419
        %v1918 = vpop.f32.mrf.mxu0
        %v1919 = vadd.f32 0.0, %v1918
        %v1920 = vpop.f32.mrf.mxu0
        %v1921 = vadd.f32 0.0, %v1920
        %v1922 = vpop.f32.mrf.mxu0
        %v1923 = vadd.f32 0.0, %v1922
        %v1924 = vpop.f32.mrf.mxu0
        %v1925 = vadd.f32 0.0, %v1924
        %1926 = vmatprep.mubr.bf16.mxu0 %v1422
        %1927 = vmatmul.mubr.bf16.gmra.mxu0 %v1421
        %v1928 = vpop.f32.mrf.mxu0
        %v1929 = vadd.f32 0.0, %v1928
        %v1930 = vpop.f32.mrf.mxu0
        %v1931 = vadd.f32 0.0, %v1930
        %v1932 = vpop.f32.mrf.mxu0
        %v1933 = vadd.f32 0.0, %v1932
        %v1934 = vpop.f32.mrf.mxu0
        %v1935 = vadd.f32 0.0, %v1934
        %1936 = vmatprep.mubr.bf16.mxu0 %v1424
        %1937 = vmatmul.mubr.bf16.gmra.mxu0 %v1423
        %v1938 = vpop.f32.mrf.mxu0
        %v1939 = vadd.f32 0.0, %v1938
        %v1940 = vpop.f32.mrf.mxu0
        %v1941 = vadd.f32 0.0, %v1940
        %v1942 = vpop.f32.mrf.mxu0
        %v1943 = vadd.f32 0.0, %v1942
        %v1944 = vpop.f32.mrf.mxu0
        %v1945 = vadd.f32 0.0, %v1944
        %1946 = vmatprep.mubr.bf16.mxu0 %v1426
        %1947 = vmatmul.mubr.bf16.gmra.mxu0 %v1425
        %v1948 = vpop.f32.mrf.mxu0
        %v1949 = vadd.f32 0.0, %v1948
        %v1950 = vpop.f32.mrf.mxu0
        %v1951 = vadd.f32 0.0, %v1950
        %v1952 = vpop.f32.mrf.mxu0
        %v1953 = vadd.f32 0.0, %v1952
        %v1954 = vpop.f32.mrf.mxu0
        %v1955 = vadd.f32 0.0, %v1954
        %1956 = vmatprep.mubr.bf16.mxu0 %v1428
        %1957 = vmatmul.mubr.bf16.gmra.mxu0 %v1427
        %v1958 = vpop.f32.mrf.mxu0
        %v1959 = vadd.f32 0.0, %v1958
        %v1960 = vpop.f32.mrf.mxu0
        %v1961 = vadd.f32 0.0, %v1960
        %v1962 = vpop.f32.mrf.mxu0
        %v1963 = vadd.f32 0.0, %v1962
        %v1964 = vpop.f32.mrf.mxu0
        %v1965 = vadd.f32 0.0, %v1964
        %1966 = vmatprep.mubr.bf16.mxu0 %v1430
        %1967 = vmatmul.mubr.bf16.gmra.mxu0 %v1429
        %v1968 = vpop.f32.mrf.mxu0
        %v1969 = vadd.f32 0.0, %v1968
        %v1970 = vpop.f32.mrf.mxu0
        %v1971 = vadd.f32 0.0, %v1970
        %v1972 = vpop.f32.mrf.mxu0
        %v1973 = vadd.f32 0.0, %v1972
        %v1974 = vpop.f32.mrf.mxu0
        %v1975 = vadd.f32 0.0, %v1974
        %1976 = vmatprep.mubr.bf16.mxu0 %v1432
        %1977 = vmatmul.mubr.bf16.gmra.mxu0 %v1431
        %v1978 = vpop.f32.mrf.mxu0
        %v1979 = vadd.f32 0.0, %v1978
        %v1980 = vpop.f32.mrf.mxu0
        %v1981 = vadd.f32 0.0, %v1980
        %v1982 = vpop.f32.mrf.mxu0
        %v1983 = vadd.f32 0.0, %v1982
        %v1984 = vpop.f32.mrf.mxu0
        %v1985 = vadd.f32 0.0, %v1984
        %1986 = vmatprep.mubr.bf16.mxu0 %v1434
        %1987 = vmatmul.mubr.bf16.gmra.mxu0 %v1433
        %v1988 = vpop.f32.mrf.mxu0
        %v1989 = vadd.f32 0.0, %v1988
        %v1990 = vpop.f32.mrf.mxu0
        %v1991 = vadd.f32 0.0, %v1990
        %v1992 = vpop.f32.mrf.mxu0
        %v1993 = vadd.f32 0.0, %v1992
        %v1994 = vpop.f32.mrf.mxu0
        %v1995 = vadd.f32 0.0, %v1994
        %1996 = vdwg.mxu0
        %v1997 = vmax.f32 %v1806, 0.0
        %v1998 = vmax.f32 %v1808, 0.0
        %v1999 = vmax.f32 %v1919, 0.0
        %v2000 = vmax.f32 %v1921, 0.0
        %v2001 = vmax.f32 %v1810, 0.0
        %v2002 = vmax.f32 %v1812, 0.0
        %v2003 = vmax.f32 %v1923, 0.0
        %v2004 = vmax.f32 %v1925, 0.0
        %v2005 = vmax.f32 %v1816, 0.0
        %v2006 = vmax.f32 %v1818, 0.0
        %v2007 = vmax.f32 %v1929, 0.0
        %v2008 = vmax.f32 %v1931, 0.0
        %v2009 = vmax.f32 %v1820, 0.0
        %v2010 = vmax.f32 %v1822, 0.0
        %v2011 = vmax.f32 %v1933, 0.0
        %v2012 = vmax.f32 %v1935, 0.0
        %v2013 = vmax.f32 %v1826, 0.0
        %v2014 = vmax.f32 %v1828, 0.0
        %v2015 = vmax.f32 %v1939, 0.0
        %v2016 = vmax.f32 %v1941, 0.0
        %v2017 = vmax.f32 %v1830, 0.0
        %v2018 = vmax.f32 %v1832, 0.0
        %v2019 = vmax.f32 %v1943, 0.0
        %v2020 = vmax.f32 %v1945, 0.0
        %v2021 = vmax.f32 %v1836, 0.0
        %v2022 = vmax.f32 %v1838, 0.0
        %v2023 = vmax.f32 %v1949, 0.0
        %v2024 = vmax.f32 %v1951, 0.0
        %v2025 = vmax.f32 %v1840, 0.0
        %v2026 = vmax.f32 %v1842, 0.0
        %v2027 = vmax.f32 %v1953, 0.0
        %v2028 = vmax.f32 %v1955, 0.0
        %v2029 = vmax.f32 %v1846, 0.0
        %v2030 = vmax.f32 %v1848, 0.0
        %v2031 = vmax.f32 %v1959, 0.0
        %v2032 = vmax.f32 %v1961, 0.0
        %v2033 = vmax.f32 %v1850, 0.0
        %v2034 = vmax.f32 %v1852, 0.0
        %v2035 = vmax.f32 %v1963, 0.0
        %v2036 = vmax.f32 %v1965, 0.0
        %v2037 = vmax.f32 %v1856, 0.0
        %v2038 = vmax.f32 %v1858, 0.0
        %v2039 = vmax.f32 %v1969, 0.0
        %v2040 = vmax.f32 %v1971, 0.0
        %v2041 = vmax.f32 %v1860, 0.0
        %v2042 = vmax.f32 %v1862, 0.0
        %v2043 = vmax.f32 %v1973, 0.0
        %v2044 = vmax.f32 %v1975, 0.0
        %v2045 = vmax.f32 %v1866, 0.0
        %v2046 = vmax.f32 %v1868, 0.0
        %v2047 = vmax.f32 %v1979, 0.0
        %v2048 = vmax.f32 %v1981, 0.0
        %v2049 = vmax.f32 %v1870, 0.0
        %v2050 = vmax.f32 %v1872, 0.0
        %v2051 = vmax.f32 %v1983, 0.0
        %v2052 = vmax.f32 %v1985, 0.0
        %v2053 = vmax.f32 %v1876, 0.0
        %v2054 = vmax.f32 %v1878, 0.0
        %v2055 = vmax.f32 %v1989, 0.0
        %v2056 = vmax.f32 %v1991, 0.0
        %v2057 = vmax.f32 %v1880, 0.0
        %v2058 = vmax.f32 %v1882, 0.0
        %v2059 = vmax.f32 %v1993, 0.0
        %v2060 = vmax.f32 %v1995, 0.0
        %v2061 = vmul.f32 %v1997, %v1997
        %v2062 = vmul.f32 %v1998, %v1998
        %v2063 = vmul.f32 %v1999, %v1999
        %v2064 = vmul.f32 %v2000, %v2000
        %v2065 = vmul.f32 %v2001, %v2001
        %v2066 = vmul.f32 %v2002, %v2002
        %v2067 = vmul.f32 %v2003, %v2003
        %v2068 = vmul.f32 %v2004, %v2004
        %v2069 = vmul.f32 %v2005, %v2005
        %v2070 = vmul.f32 %v2006, %v2006
        %v2071 = vmul.f32 %v2007, %v2007
        %v2072 = vmul.f32 %v2008, %v2008
        %v2073 = vmul.f32 %v2009, %v2009
        %v2074 = vmul.f32 %v2010, %v2010
        %v2075 = vmul.f32 %v2011, %v2011
        %v2076 = vmul.f32 %v2012, %v2012
        %v2077 = vmul.f32 %v2013, %v2013
        %v2078 = vmul.f32 %v2014, %v2014
        %v2079 = vmul.f32 %v2015, %v2015
        %v2080 = vmul.f32 %v2016, %v2016
        %v2081 = vmul.f32 %v2017, %v2017
        %v2082 = vmul.f32 %v2018, %v2018
        %v2083 = vmul.f32 %v2019, %v2019
        %v2084 = vmul.f32 %v2020, %v2020
        %v2085 = vmul.f32 %v2021, %v2021
        %v2086 = vmul.f32 %v2022, %v2022
        %v2087 = vmul.f32 %v2023, %v2023
        %v2088 = vmul.f32 %v2024, %v2024
        %v2089 = vmul.f32 %v2025, %v2025
        %v2090 = vmul.f32 %v2026, %v2026
        %v2091 = vmul.f32 %v2027, %v2027
        %v2092 = vmul.f32 %v2028, %v2028
        %v2093 = vmul.f32 %v2029, %v2029
        %v2094 = vmul.f32 %v2030, %v2030
        %v2095 = vmul.f32 %v2031, %v2031
        %v2096 = vmul.f32 %v2032, %v2032
        %v2097 = vmul.f32 %v2033, %v2033
        %v2098 = vmul.f32 %v2034, %v2034
        %v2099 = vmul.f32 %v2035, %v2035
        %v2100 = vmul.f32 %v2036, %v2036
        %v2101 = vmul.f32 %v2037, %v2037
        %v2102 = vmul.f32 %v2038, %v2038
        %v2103 = vmul.f32 %v2039, %v2039
        %v2104 = vmul.f32 %v2040, %v2040
        %v2105 = vmul.f32 %v2041, %v2041
        %v2106 = vmul.f32 %v2042, %v2042
        %v2107 = vmul.f32 %v2043, %v2043
        %v2108 = vmul.f32 %v2044, %v2044
        %v2109 = vmul.f32 %v2045, %v2045
        %v2110 = vmul.f32 %v2046, %v2046
        %v2111 = vmul.f32 %v2047, %v2047
        %v2112 = vmul.f32 %v2048, %v2048
        %v2113 = vmul.f32 %v2049, %v2049
        %v2114 = vmul.f32 %v2050, %v2050
        %v2115 = vmul.f32 %v2051, %v2051
        %v2116 = vmul.f32 %v2052, %v2052
        %v2117 = vmul.f32 %v2053, %v2053
        %v2118 = vmul.f32 %v2054, %v2054
        %v2119 = vmul.f32 %v2055, %v2055
        %v2120 = vmul.f32 %v2056, %v2056
        %v2121 = vmul.f32 %v2057, %v2057
        %v2122 = vmul.f32 %v2058, %v2058
        %v2123 = vmul.f32 %v2059, %v2059
        %v2124 = vmul.f32 %v2060, %v2060
        %v2125 = vld [vmem:[#allocation4] sm:$0xff]
        %v2126 = vld [vmem:[#allocation4 + $0x8] sm:$0xff]
        %v2127 = vld [vmem:[#allocation4 + $0x10] sm:$0xff]
        %v2128 = vld [vmem:[#allocation4 + $0x18] sm:$0xff]
        %v2129 = vld [vmem:[#allocation4 + $0x20] sm:$0xff]
        %v2130 = vld [vmem:[#allocation4 + $0x28] sm:$0xff]
        %v2131 = vld [vmem:[#allocation4 + $0x30] sm:$0xff]
        %v2132 = vld [vmem:[#allocation4 + $0x38] sm:$0xff]
        %v2133 = vld [vmem:[#allocation4 + $0x40] sm:$0xff]
        %v2134 = vld [vmem:[#allocation4 + $0x48] sm:$0xff]
        %v2135 = vld [vmem:[#allocation4 + $0x50] sm:$0xff]
        %v2136 = vld [vmem:[#allocation4 + $0x58] sm:$0xff]
        %v2137 = vld [vmem:[#allocation4 + $0x60] sm:$0xff]
        %v2138 = vld [vmem:[#allocation4 + $0x68] sm:$0xff]
        %v2139 = vld [vmem:[#allocation4 + $0x70] sm:$0xff]
        %v2140 = vld [vmem:[#allocation4 + $0x78] sm:$0xff]
        %v2141 = vld [vmem:[#allocation4 + $0x80] sm:$0xff]
        %v2142 = vld [vmem:[#allocation4 + $0x88] sm:$0xff]
        %v2143 = vld [vmem:[#allocation4 + $0x90] sm:$0xff]
        %v2144 = vld [vmem:[#allocation4 + $0x98] sm:$0xff]
        %v2145 = vld [vmem:[#allocation4 + $0xa0] sm:$0xff]
        %v2146 = vld [vmem:[#allocation4 + $0xa8] sm:$0xff]
        %v2147 = vld [vmem:[#allocation4 + $0xb0] sm:$0xff]
        %v2148 = vld [vmem:[#allocation4 + $0xb8] sm:$0xff]
        %v2149 = vld [vmem:[#allocation4 + $0xc0] sm:$0xff]
        %v2150 = vld [vmem:[#allocation4 + $0xc8] sm:$0xff]
        %v2151 = vld [vmem:[#allocation4 + $0xd0] sm:$0xff]
        %v2152 = vld [vmem:[#allocation4 + $0xd8] sm:$0xff]
        %v2153 = vld [vmem:[#allocation4 + $0xe0] sm:$0xff]
        %v2154 = vld [vmem:[#allocation4 + $0xe8] sm:$0xff]
        %v2155 = vld [vmem:[#allocation4 + $0xf0] sm:$0xff]
        %v2156 = vld [vmem:[#allocation4 + $0xf8] sm:$0xff]
        %v2157 = vpack.c.bf16 %v2065, %v2061
        %v2158 = vpack.c.bf16 %v2066, %v2062
        %v2159 = vpack.c.bf16 %v2067, %v2063
        %v2160 = vpack.c.bf16 %v2068, %v2064
        %v2161 = vpack.c.bf16 %v2073, %v2069
        %v2162 = vpack.c.bf16 %v2074, %v2070
        %v2163 = vpack.c.bf16 %v2075, %v2071
        %v2164 = vpack.c.bf16 %v2076, %v2072
        %v2165 = vpack.c.bf16 %v2081, %v2077
        %v2166 = vpack.c.bf16 %v2082, %v2078
        %v2167 = vpack.c.bf16 %v2083, %v2079
        %v2168 = vpack.c.bf16 %v2084, %v2080
        %v2169 = vpack.c.bf16 %v2089, %v2085
        %v2170 = vpack.c.bf16 %v2090, %v2086
        %v2171 = vpack.c.bf16 %v2091, %v2087
        %v2172 = vpack.c.bf16 %v2092, %v2088
        %v2173 = vpack.c.bf16 %v2097, %v2093
        %v2174 = vpack.c.bf16 %v2098, %v2094
        %v2175 = vpack.c.bf16 %v2099, %v2095
        %v2176 = vpack.c.bf16 %v2100, %v2096
        %v2177 = vpack.c.bf16 %v2105, %v2101
        %v2178 = vpack.c.bf16 %v2106, %v2102
        %v2179 = vpack.c.bf16 %v2107, %v2103
        %v2180 = vpack.c.bf16 %v2108, %v2104
        %v2181 = vpack.c.bf16 %v2113, %v2109
        %v2182 = vpack.c.bf16 %v2114, %v2110
        %v2183 = vpack.c.bf16 %v2115, %v2111
        %v2184 = vpack.c.bf16 %v2116, %v2112
        %v2185 = vpack.c.bf16 %v2121, %v2117
        %v2186 = vpack.c.bf16 %v2122, %v2118
        %v2187 = vpack.c.bf16 %v2123, %v2119
        %v2188 = vpack.c.bf16 %v2124, %v2120
        %v2189 = vld [vmem:[%s395] sm:$0xff]
        %v2190 = vld [vmem:[%s395 + $0x8] sm:$0xff]
        %v2191 = vld [vmem:[%s395 + $0x10] sm:$0xff]
        %v2192 = vld [vmem:[%s395 + $0x18] sm:$0xff]
        %v2193 = vld [vmem:[%s395 + $0x20] sm:$0xff]
        %v2194 = vld [vmem:[%s395 + $0x28] sm:$0xff]
        %v2195 = vld [vmem:[%s395 + $0x30] sm:$0xff]
        %v2196 = vld [vmem:[%s395 + $0x38] sm:$0xff]
        %v2197 = vld [vmem:[%s395 + $0x40] sm:$0xff]
        %v2198 = vld [vmem:[%s395 + $0x48] sm:$0xff]
        %v2199 = vld [vmem:[%s395 + $0x50] sm:$0xff]
        %v2200 = vld [vmem:[%s395 + $0x58] sm:$0xff]
        %v2201 = vld [vmem:[%s395 + $0x60] sm:$0xff]
        %v2202 = vld [vmem:[%s395 + $0x68] sm:$0xff]
        %v2203 = vld [vmem:[%s395 + $0x70] sm:$0xff]
        %v2204 = vld [vmem:[%s395 + $0x78] sm:$0xff]
        %v2205 = vld [vmem:[%s395 + $0x80] sm:$0xff]
        %v2206 = vld [vmem:[%s395 + $0x88] sm:$0xff]
        %v2207 = vld [vmem:[%s395 + $0x90] sm:$0xff]
        %v2208 = vld [vmem:[%s395 + $0x98] sm:$0xff]
        %v2209 = vld [vmem:[%s395 + $0xa0] sm:$0xff]
        %v2210 = vld [vmem:[%s395 + $0xa8] sm:$0xff]
        %v2211 = vld [vmem:[%s395 + $0xb0] sm:$0xff]
        %v2212 = vld [vmem:[%s395 + $0xb8] sm:$0xff]
        %v2213 = vld [vmem:[%s395 + $0xc0] sm:$0xff]
        %v2214 = vld [vmem:[%s395 + $0xc8] sm:$0xff]
        %v2215 = vld [vmem:[%s395 + $0xd0] sm:$0xff]
        %v2216 = vld [vmem:[%s395 + $0xd8] sm:$0xff]
        %v2217 = vld [vmem:[%s395 + $0xe0] sm:$0xff]
        %v2218 = vld [vmem:[%s395 + $0xe8] sm:$0xff]
        %v2219 = vld [vmem:[%s395 + $0xf0] sm:$0xff]
        %v2220 = vld [vmem:[%s395 + $0xf8] sm:$0xff]
        %v2221 = vld [vmem:[%s395 + $0x100] sm:$0xff]
        %v2222 = vld [vmem:[%s395 + $0x108] sm:$0xff]
        %v2223 = vld [vmem:[%s395 + $0x110] sm:$0xff]
        %v2224 = vld [vmem:[%s395 + $0x118] sm:$0xff]
        %v2225 = vld [vmem:[%s395 + $0x120] sm:$0xff]
        %v2226 = vld [vmem:[%s395 + $0x128] sm:$0xff]
        %v2227 = vld [vmem:[%s395 + $0x130] sm:$0xff]
        %v2228 = vld [vmem:[%s395 + $0x138] sm:$0xff]
        %v2229 = vld [vmem:[%s395 + $0x140] sm:$0xff]
        %v2230 = vld [vmem:[%s395 + $0x148] sm:$0xff]
        %v2231 = vld [vmem:[%s395 + $0x150] sm:$0xff]
        %v2232 = vld [vmem:[%s395 + $0x158] sm:$0xff]
        %v2233 = vld [vmem:[%s395 + $0x160] sm:$0xff]
        %v2234 = vld [vmem:[%s395 + $0x168] sm:$0xff]
        %v2235 = vld [vmem:[%s395 + $0x170] sm:$0xff]
        %v2236 = vld [vmem:[%s395 + $0x178] sm:$0xff]
        %v2237 = vld [vmem:[%s395 + $0x180] sm:$0xff]
        %v2238 = vld [vmem:[%s395 + $0x188] sm:$0xff]
        %v2239 = vld [vmem:[%s395 + $0x190] sm:$0xff]
        %v2240 = vld [vmem:[%s395 + $0x198] sm:$0xff]
        %v2241 = vld [vmem:[%s395 + $0x1a0] sm:$0xff]
        %v2242 = vld [vmem:[%s395 + $0x1a8] sm:$0xff]
        %v2243 = vld [vmem:[%s395 + $0x1b0] sm:$0xff]
        %v2244 = vld [vmem:[%s395 + $0x1b8] sm:$0xff]
        %v2245 = vld [vmem:[%s395 + $0x1c0] sm:$0xff]
        %v2246 = vld [vmem:[%s395 + $0x1c8] sm:$0xff]
        %v2247 = vld [vmem:[%s395 + $0x1d0] sm:$0xff]
        %v2248 = vld [vmem:[%s395 + $0x1d8] sm:$0xff]
        %v2249 = vld [vmem:[%s395 + $0x1e0] sm:$0xff]
        %v2250 = vld [vmem:[%s395 + $0x1e8] sm:$0xff]
        %v2251 = vld [vmem:[%s395 + $0x1f0] sm:$0xff]
        %v2252 = vld [vmem:[%s395 + $0x1f8] sm:$0xff]
        %v2317 = vunpack.c.l.b16 %v2189
        %v2318 = vunpack.c.h.b16 %v2189
        %v2319 = vunpack.c.l.b16 %v2190
        %v2320 = vunpack.c.h.b16 %v2190
        %v2321 = vunpack.c.l.b16 %v2191
        %v2322 = vunpack.c.h.b16 %v2191
        %v2323 = vunpack.c.l.b16 %v2192
        %v2324 = vunpack.c.h.b16 %v2192
        %v2325 = vunpack.c.l.b16 %v2193
        %v2326 = vunpack.c.h.b16 %v2193
        %v2327 = vunpack.c.l.b16 %v2194
        %v2328 = vunpack.c.h.b16 %v2194
        %v2329 = vunpack.c.l.b16 %v2195
        %v2330 = vunpack.c.h.b16 %v2195
        %v2331 = vunpack.c.l.b16 %v2196
        %v2332 = vunpack.c.h.b16 %v2196
        %v2333 = vunpack.c.l.b16 %v2197
        %v2334 = vunpack.c.h.b16 %v2197
        %v2335 = vunpack.c.l.b16 %v2198
        %v2336 = vunpack.c.h.b16 %v2198
        %v2337 = vunpack.c.l.b16 %v2199
        %v2338 = vunpack.c.h.b16 %v2199
        %v2339 = vunpack.c.l.b16 %v2200
        %v2340 = vunpack.c.h.b16 %v2200
        %v2341 = vunpack.c.l.b16 %v2201
        %v2342 = vunpack.c.h.b16 %v2201
        %v2343 = vunpack.c.l.b16 %v2202
        %v2344 = vunpack.c.h.b16 %v2202
        %v2345 = vunpack.c.l.b16 %v2203
        %v2346 = vunpack.c.h.b16 %v2203
        %v2347 = vunpack.c.l.b16 %v2204
        %v2348 = vunpack.c.h.b16 %v2204
        %v2349 = vunpack.c.l.b16 %v2205
        %v2350 = vunpack.c.h.b16 %v2205
        %v2351 = vunpack.c.l.b16 %v2206
        %v2352 = vunpack.c.h.b16 %v2206
        %v2353 = vunpack.c.l.b16 %v2207
        %v2354 = vunpack.c.h.b16 %v2207
        %v2355 = vunpack.c.l.b16 %v2208
        %v2356 = vunpack.c.h.b16 %v2208
        %v2357 = vunpack.c.l.b16 %v2209
        %v2358 = vunpack.c.h.b16 %v2209
        %v2359 = vunpack.c.l.b16 %v2210
        %v2360 = vunpack.c.h.b16 %v2210
        %v2361 = vunpack.c.l.b16 %v2211
        %v2362 = vunpack.c.h.b16 %v2211
        %v2363 = vunpack.c.l.b16 %v2212
        %v2364 = vunpack.c.h.b16 %v2212
        %v2365 = vunpack.c.l.b16 %v2213
        %v2366 = vunpack.c.h.b16 %v2213
        %v2367 = vunpack.c.l.b16 %v2214
        %v2368 = vunpack.c.h.b16 %v2214
        %v2369 = vunpack.c.l.b16 %v2215
        %v2370 = vunpack.c.h.b16 %v2215
        %v2371 = vunpack.c.l.b16 %v2216
        %v2372 = vunpack.c.h.b16 %v2216
        %v2373 = vunpack.c.l.b16 %v2217
        %v2374 = vunpack.c.h.b16 %v2217
        %v2375 = vunpack.c.l.b16 %v2218
        %v2376 = vunpack.c.h.b16 %v2218
        %v2377 = vunpack.c.l.b16 %v2219
        %v2378 = vunpack.c.h.b16 %v2219
        %v2379 = vunpack.c.l.b16 %v2220
        %v2380 = vunpack.c.h.b16 %v2220
        %v2381 = vunpack.c.l.b16 %v2221
        %v2382 = vunpack.c.h.b16 %v2221
        %v2383 = vunpack.c.l.b16 %v2222
        %v2384 = vunpack.c.h.b16 %v2222
        %v2385 = vunpack.c.l.b16 %v2223
        %v2386 = vunpack.c.h.b16 %v2223
        %v2387 = vunpack.c.l.b16 %v2224
        %v2388 = vunpack.c.h.b16 %v2224
        %v2389 = vunpack.c.l.b16 %v2225
        %v2390 = vunpack.c.h.b16 %v2225
        %v2391 = vunpack.c.l.b16 %v2226
        %v2392 = vunpack.c.h.b16 %v2226
        %v2393 = vunpack.c.l.b16 %v2227
        %v2394 = vunpack.c.h.b16 %v2227
        %v2395 = vunpack.c.l.b16 %v2228
        %v2396 = vunpack.c.h.b16 %v2228
        %v2397 = vunpack.c.l.b16 %v2229
        %v2398 = vunpack.c.h.b16 %v2229
        %v2399 = vunpack.c.l.b16 %v2230
        %v2400 = vunpack.c.h.b16 %v2230
        %v2401 = vunpack.c.l.b16 %v2231
        %v2402 = vunpack.c.h.b16 %v2231
        %v2403 = vunpack.c.l.b16 %v2232
        %v2404 = vunpack.c.h.b16 %v2232
        %v2405 = vunpack.c.l.b16 %v2233
        %v2406 = vunpack.c.h.b16 %v2233
        %v2407 = vunpack.c.l.b16 %v2234
        %v2408 = vunpack.c.h.b16 %v2234
        %v2409 = vunpack.c.l.b16 %v2235
        %v2410 = vunpack.c.h.b16 %v2235
        %v2411 = vunpack.c.l.b16 %v2236
        %v2412 = vunpack.c.h.b16 %v2236
        %v2413 = vunpack.c.l.b16 %v2237
        %v2414 = vunpack.c.h.b16 %v2237
        %v2415 = vunpack.c.l.b16 %v2238
        %v2416 = vunpack.c.h.b16 %v2238
        %v2417 = vunpack.c.l.b16 %v2239
        %v2418 = vunpack.c.h.b16 %v2239
        %v2419 = vunpack.c.l.b16 %v2240
        %v2420 = vunpack.c.h.b16 %v2240
        %v2421 = vunpack.c.l.b16 %v2241
        %v2422 = vunpack.c.h.b16 %v2241
        %v2423 = vunpack.c.l.b16 %v2242
        %v2424 = vunpack.c.h.b16 %v2242
        %v2425 = vunpack.c.l.b16 %v2243
        %v2426 = vunpack.c.h.b16 %v2243
        %v2427 = vunpack.c.l.b16 %v2244
        %v2428 = vunpack.c.h.b16 %v2244
        %v2429 = vunpack.c.l.b16 %v2245
        %v2430 = vunpack.c.h.b16 %v2245
        %v2431 = vunpack.c.l.b16 %v2246
        %v2432 = vunpack.c.h.b16 %v2246
        %v2433 = vunpack.c.l.b16 %v2247
        %v2434 = vunpack.c.h.b16 %v2247
        %v2435 = vunpack.c.l.b16 %v2248
        %v2436 = vunpack.c.h.b16 %v2248
        %v2437 = vunpack.c.l.b16 %v2249
        %v2438 = vunpack.c.h.b16 %v2249
        %v2439 = vunpack.c.l.b16 %v2250
        %v2440 = vunpack.c.h.b16 %v2250
        %v2441 = vunpack.c.l.b16 %v2251
        %v2442 = vunpack.c.h.b16 %v2251
        %v2443 = vunpack.c.l.b16 %v2252
        %v2444 = vunpack.c.h.b16 %v2252
        %v2445 = vpack.c.b16 %v2321, %v2317
        %v2446 = vpack.c.b16 %v2322, %v2318
        %v2447 = vpack.c.b16 %v2323, %v2319
        %v2448 = vpack.c.b16 %v2324, %v2320
        %v2449 = vpack.c.b16 %v2329, %v2325
        %v2450 = vpack.c.b16 %v2330, %v2326
        %v2451 = vpack.c.b16 %v2331, %v2327
        %v2452 = vpack.c.b16 %v2332, %v2328
        %v2453 = vpack.c.b16 %v2337, %v2333
        %v2454 = vpack.c.b16 %v2338, %v2334
        %v2455 = vpack.c.b16 %v2339, %v2335
        %v2456 = vpack.c.b16 %v2340, %v2336
        %v2457 = vpack.c.b16 %v2345, %v2341
        %v2458 = vpack.c.b16 %v2346, %v2342
        %v2459 = vpack.c.b16 %v2347, %v2343
        %v2460 = vpack.c.b16 %v2348, %v2344
        %v2461 = vpack.c.b16 %v2353, %v2349
        %v2462 = vpack.c.b16 %v2354, %v2350
        %v2463 = vpack.c.b16 %v2355, %v2351
        %v2464 = vpack.c.b16 %v2356, %v2352
        %v2465 = vpack.c.b16 %v2361, %v2357
        %v2466 = vpack.c.b16 %v2362, %v2358
        %v2467 = vpack.c.b16 %v2363, %v2359
        %v2468 = vpack.c.b16 %v2364, %v2360
        %v2469 = vpack.c.b16 %v2369, %v2365
        %v2470 = vpack.c.b16 %v2370, %v2366
        %v2471 = vpack.c.b16 %v2371, %v2367
        %v2472 = vpack.c.b16 %v2372, %v2368
        %v2473 = vpack.c.b16 %v2377, %v2373
        %v2474 = vpack.c.b16 %v2378, %v2374
        %v2475 = vpack.c.b16 %v2379, %v2375
        %v2476 = vpack.c.b16 %v2380, %v2376
        %v2477 = vpack.c.b16 %v2385, %v2381
        %v2478 = vpack.c.b16 %v2386, %v2382
        %v2479 = vpack.c.b16 %v2387, %v2383
        %v2480 = vpack.c.b16 %v2388, %v2384
        %v2481 = vpack.c.b16 %v2393, %v2389
        %v2482 = vpack.c.b16 %v2394, %v2390
        %v2483 = vpack.c.b16 %v2395, %v2391
        %v2484 = vpack.c.b16 %v2396, %v2392
        %v2485 = vpack.c.b16 %v2401, %v2397
        %v2486 = vpack.c.b16 %v2402, %v2398
        %v2487 = vpack.c.b16 %v2403, %v2399
        %v2488 = vpack.c.b16 %v2404, %v2400
        %v2489 = vpack.c.b16 %v2409, %v2405
        %v2490 = vpack.c.b16 %v2410, %v2406
        %v2491 = vpack.c.b16 %v2411, %v2407
        %v2492 = vpack.c.b16 %v2412, %v2408
        %v2493 = vpack.c.b16 %v2417, %v2413
        %v2494 = vpack.c.b16 %v2418, %v2414
        %v2495 = vpack.c.b16 %v2419, %v2415
        %v2496 = vpack.c.b16 %v2420, %v2416
        %v2497 = vpack.c.b16 %v2425, %v2421
        %v2498 = vpack.c.b16 %v2426, %v2422
        %v2499 = vpack.c.b16 %v2427, %v2423
        %v2500 = vpack.c.b16 %v2428, %v2424
        %v2501 = vpack.c.b16 %v2433, %v2429
        %v2502 = vpack.c.b16 %v2434, %v2430
        %v2503 = vpack.c.b16 %v2435, %v2431
        %v2504 = vpack.c.b16 %v2436, %v2432
        %v2505 = vpack.c.b16 %v2441, %v2437
        %v2506 = vpack.c.b16 %v2442, %v2438
        %v2507 = vpack.c.b16 %v2443, %v2439
        %v2508 = vpack.c.b16 %v2444, %v2440
        %2573 = vmatprep.subr.bf16.mxu0 %v2474
        %2574 = vmatpush1.bf16.xpose.msra.mxu0 %v2473
        %2575 = vmatprep.subr.bf16.mxu0 %v2470
        %2576 = vmatpush1.bf16.xpose.msra.mxu0 %v2469
        %2577 = vmatprep.subr.bf16.mxu0 %v2466
        %2578 = vmatpush1.bf16.xpose.msra.mxu0 %v2465
        %2579 = vmatprep.subr.bf16.mxu0 %v2462
        %2580 = vmatpush1.bf16.xpose.msra.mxu0 %v2461
        %2581 = vmatprep.subr.bf16.mxu0 %v2458
        %2582 = vmatpush1.bf16.xpose.msra.mxu0 %v2457
        %2583 = vmatprep.subr.bf16.mxu0 %v2454
        %2584 = vmatpush1.bf16.xpose.msra.mxu0 %v2453
        %2585 = vmatprep.subr.bf16.mxu0 %v2450
        %2586 = vmatpush1.bf16.xpose.msra.mxu0 %v2449
        %2587 = vmatprep.subr.bf16.mxu0 %v2446
        %2588 = vmatpush1.bf16.xpose.msra.mxu0 %v2445
        %2589 = vmatprep.subr.bf16.mxu0 %v2506
        %2590 = vmatpush2.bf16.xpose.msra.mxu0 %v2505
        %2591 = vmatprep.subr.bf16.mxu0 %v2502
        %2592 = vmatpush2.bf16.xpose.msra.mxu0 %v2501
        %2593 = vmatprep.subr.bf16.mxu0 %v2498
        %2594 = vmatpush2.bf16.xpose.msra.mxu0 %v2497
        %2595 = vmatprep.subr.bf16.mxu0 %v2494
        %2596 = vmatpush2.bf16.xpose.msra.mxu0 %v2493
        %2597 = vmatprep.subr.bf16.mxu0 %v2490
        %2598 = vmatpush2.bf16.xpose.msra.mxu0 %v2489
        %2599 = vmatprep.subr.bf16.mxu0 %v2486
        %2600 = vmatpush2.bf16.xpose.msra.mxu0 %v2485
        %2601 = vmatprep.subr.bf16.mxu0 %v2482
        %2602 = vmatpush2.bf16.xpose.msra.mxu0 %v2481
        %2603 = vmatprep.subr.bf16.mxu0 %v2478
        %2604 = vmatpush2.bf16.xpose.msra.mxu0 %v2477
        %2605 = vmatprep.mubr.bf16.mxu0 %v2158
        %2606 = vmatmul.mubr.bf16.gmra.mxu0 %v2157
        %v2607 = vpop.f32.mrf.mxu0
        %v2608 = vadd.f32 0.0, %v2607
        %v2609 = vpop.f32.mrf.mxu0
        %v2610 = vadd.f32 0.0, %v2609
        %v2611 = vpop.f32.mrf.mxu0
        %v2612 = vadd.f32 0.0, %v2611
        %v2613 = vpop.f32.mrf.mxu0
        %v2614 = vadd.f32 0.0, %v2613
        %2615 = vmatprep.mubr.bf16.mxu0 %v2162
        %2616 = vmatmul.mubr.bf16.gmra.mxu0 %v2161
        %v2617 = vpop.f32.mrf.mxu0
        %v2618 = vadd.f32 0.0, %v2617
        %v2619 = vpop.f32.mrf.mxu0
        %v2620 = vadd.f32 0.0, %v2619
        %v2621 = vpop.f32.mrf.mxu0
        %v2622 = vadd.f32 0.0, %v2621
        %v2623 = vpop.f32.mrf.mxu0
        %v2624 = vadd.f32 0.0, %v2623
        %2625 = vmatprep.mubr.bf16.mxu0 %v2166
        %2626 = vmatmul.mubr.bf16.gmra.mxu0 %v2165
        %v2627 = vpop.f32.mrf.mxu0
        %v2628 = vadd.f32 0.0, %v2627
        %v2629 = vpop.f32.mrf.mxu0
        %v2630 = vadd.f32 0.0, %v2629
        %v2631 = vpop.f32.mrf.mxu0
        %v2632 = vadd.f32 0.0, %v2631
        %v2633 = vpop.f32.mrf.mxu0
        %v2634 = vadd.f32 0.0, %v2633
        %2635 = vmatprep.mubr.bf16.mxu0 %v2170
        %2636 = vmatmul.mubr.bf16.gmra.mxu0 %v2169
        %v2637 = vpop.f32.mrf.mxu0
        %v2638 = vadd.f32 0.0, %v2637
        %v2639 = vpop.f32.mrf.mxu0
        %v2640 = vadd.f32 0.0, %v2639
        %v2641 = vpop.f32.mrf.mxu0
        %v2642 = vadd.f32 0.0, %v2641
        %v2643 = vpop.f32.mrf.mxu0
        %v2644 = vadd.f32 0.0, %v2643
        %2645 = vmatprep.mubr.bf16.mxu0 %v2174
        %2646 = vmatmul.mubr.bf16.gmra.mxu0 %v2173
        %v2647 = vpop.f32.mrf.mxu0
        %v2648 = vadd.f32 0.0, %v2647
        %v2649 = vpop.f32.mrf.mxu0
        %v2650 = vadd.f32 0.0, %v2649
        %v2651 = vpop.f32.mrf.mxu0
        %v2652 = vadd.f32 0.0, %v2651
        %v2653 = vpop.f32.mrf.mxu0
        %v2654 = vadd.f32 0.0, %v2653
        %2655 = vmatprep.mubr.bf16.mxu0 %v2178
        %2656 = vmatmul.mubr.bf16.gmra.mxu0 %v2177
        %v2657 = vpop.f32.mrf.mxu0
        %v2658 = vadd.f32 0.0, %v2657
        %v2659 = vpop.f32.mrf.mxu0
        %v2660 = vadd.f32 0.0, %v2659
        %v2661 = vpop.f32.mrf.mxu0
        %v2662 = vadd.f32 0.0, %v2661
        %v2663 = vpop.f32.mrf.mxu0
        %v2664 = vadd.f32 0.0, %v2663
        %2665 = vmatprep.mubr.bf16.mxu0 %v2182
        %2666 = vmatmul.mubr.bf16.gmra.mxu0 %v2181
        %v2667 = vpop.f32.mrf.mxu0
        %v2668 = vadd.f32 0.0, %v2667
        %v2669 = vpop.f32.mrf.mxu0
        %v2670 = vadd.f32 0.0, %v2669
        %v2671 = vpop.f32.mrf.mxu0
        %v2672 = vadd.f32 0.0, %v2671
        %v2673 = vpop.f32.mrf.mxu0
        %v2674 = vadd.f32 0.0, %v2673
        %2675 = vmatprep.mubr.bf16.mxu0 %v2186
        %2676 = vmatmul.mubr.bf16.gmra.mxu0 %v2185
        %v2677 = vpop.f32.mrf.mxu0
        %v2678 = vadd.f32 0.0, %v2677
        %v2679 = vpop.f32.mrf.mxu0
        %v2680 = vadd.f32 0.0, %v2679
        %v2681 = vpop.f32.mrf.mxu0
        %v2682 = vadd.f32 0.0, %v2681
        %v2683 = vpop.f32.mrf.mxu0
        %v2684 = vadd.f32 0.0, %v2683
        %2685 = vdwg.mxu0
        %2686 = vmatprep.subr.bf16.mxu0 %v2476
        %2687 = vmatpush1.bf16.xpose.msra.mxu0 %v2475
        %2688 = vmatprep.subr.bf16.mxu0 %v2472
        %2689 = vmatpush1.bf16.xpose.msra.mxu0 %v2471
        %2690 = vmatprep.subr.bf16.mxu0 %v2468
        %2691 = vmatpush1.bf16.xpose.msra.mxu0 %v2467
        %2692 = vmatprep.subr.bf16.mxu0 %v2464
        %2693 = vmatpush1.bf16.xpose.msra.mxu0 %v2463
        %2694 = vmatprep.subr.bf16.mxu0 %v2460
        %2695 = vmatpush1.bf16.xpose.msra.mxu0 %v2459
        %2696 = vmatprep.subr.bf16.mxu0 %v2456
        %2697 = vmatpush1.bf16.xpose.msra.mxu0 %v2455
        %2698 = vmatprep.subr.bf16.mxu0 %v2452
        %2699 = vmatpush1.bf16.xpose.msra.mxu0 %v2451
        %2700 = vmatprep.subr.bf16.mxu0 %v2448
        %2701 = vmatpush1.bf16.xpose.msra.mxu0 %v2447
        %2702 = vmatprep.subr.bf16.mxu0 %v2508
        %2703 = vmatpush2.bf16.xpose.msra.mxu0 %v2507
        %2704 = vmatprep.subr.bf16.mxu0 %v2504
        %2705 = vmatpush2.bf16.xpose.msra.mxu0 %v2503
        %2706 = vmatprep.subr.bf16.mxu0 %v2500
        %2707 = vmatpush2.bf16.xpose.msra.mxu0 %v2499
        %2708 = vmatprep.subr.bf16.mxu0 %v2496
        %2709 = vmatpush2.bf16.xpose.msra.mxu0 %v2495
        %2710 = vmatprep.subr.bf16.mxu0 %v2492
        %2711 = vmatpush2.bf16.xpose.msra.mxu0 %v2491
        %2712 = vmatprep.subr.bf16.mxu0 %v2488
        %2713 = vmatpush2.bf16.xpose.msra.mxu0 %v2487
        %2714 = vmatprep.subr.bf16.mxu0 %v2484
        %2715 = vmatpush2.bf16.xpose.msra.mxu0 %v2483
        %2716 = vmatprep.subr.bf16.mxu0 %v2480
        %2717 = vmatpush2.bf16.xpose.msra.mxu0 %v2479
        %2718 = vmatprep.mubr.bf16.mxu0 %v2160
        %2719 = vmatmul.mubr.bf16.gmra.mxu0 %v2159
        %v2720 = vpop.f32.mrf.mxu0
        %v2721 = vadd.f32 %v2608, %v2720
        %v2722 = vpop.f32.mrf.mxu0
        %v2723 = vadd.f32 %v2610, %v2722
        %v2724 = vpop.f32.mrf.mxu0
        %v2725 = vadd.f32 %v2612, %v2724
        %v2726 = vpop.f32.mrf.mxu0
        %v2727 = vadd.f32 %v2614, %v2726
        %2728 = vmatprep.mubr.bf16.mxu0 %v2164
        %2729 = vmatmul.mubr.bf16.gmra.mxu0 %v2163
        %v2730 = vpop.f32.mrf.mxu0
        %v2731 = vadd.f32 %v2618, %v2730
        %v2732 = vpop.f32.mrf.mxu0
        %v2733 = vadd.f32 %v2620, %v2732
        %v2734 = vpop.f32.mrf.mxu0
        %v2735 = vadd.f32 %v2622, %v2734
        %v2736 = vpop.f32.mrf.mxu0
        %v2737 = vadd.f32 %v2624, %v2736
        %2738 = vmatprep.mubr.bf16.mxu0 %v2168
        %2739 = vmatmul.mubr.bf16.gmra.mxu0 %v2167
        %v2740 = vpop.f32.mrf.mxu0
        %v2741 = vadd.f32 %v2628, %v2740
        %v2742 = vpop.f32.mrf.mxu0
        %v2743 = vadd.f32 %v2630, %v2742
        %v2744 = vpop.f32.mrf.mxu0
        %v2745 = vadd.f32 %v2632, %v2744
        %v2746 = vpop.f32.mrf.mxu0
        %v2747 = vadd.f32 %v2634, %v2746
        %2748 = vmatprep.mubr.bf16.mxu0 %v2172
        %2749 = vmatmul.mubr.bf16.gmra.mxu0 %v2171
        %v2750 = vpop.f32.mrf.mxu0
        %v2751 = vadd.f32 %v2638, %v2750
        %v2752 = vpop.f32.mrf.mxu0
        %v2753 = vadd.f32 %v2640, %v2752
        %v2754 = vpop.f32.mrf.mxu0
        %v2755 = vadd.f32 %v2642, %v2754
        %v2756 = vpop.f32.mrf.mxu0
        %v2757 = vadd.f32 %v2644, %v2756
        %2758 = vmatprep.mubr.bf16.mxu0 %v2176
        %2759 = vmatmul.mubr.bf16.gmra.mxu0 %v2175
        %v2760 = vpop.f32.mrf.mxu0
        %v2761 = vadd.f32 %v2648, %v2760
        %v2762 = vpop.f32.mrf.mxu0
        %v2763 = vadd.f32 %v2650, %v2762
        %v2764 = vpop.f32.mrf.mxu0
        %v2765 = vadd.f32 %v2652, %v2764
        %v2766 = vpop.f32.mrf.mxu0
        %v2767 = vadd.f32 %v2654, %v2766
        %2768 = vmatprep.mubr.bf16.mxu0 %v2180
        %2769 = vmatmul.mubr.bf16.gmra.mxu0 %v2179
        %v2770 = vpop.f32.mrf.mxu0
        %v2771 = vadd.f32 %v2658, %v2770
        %v2772 = vpop.f32.mrf.mxu0
        %v2773 = vadd.f32 %v2660, %v2772
        %v2774 = vpop.f32.mrf.mxu0
        %v2775 = vadd.f32 %v2662, %v2774
        %v2776 = vpop.f32.mrf.mxu0
        %v2777 = vadd.f32 %v2664, %v2776
        %2778 = vmatprep.mubr.bf16.mxu0 %v2184
        %2779 = vmatmul.mubr.bf16.gmra.mxu0 %v2183
        %v2780 = vpop.f32.mrf.mxu0
        %v2781 = vadd.f32 %v2668, %v2780
        %v2782 = vpop.f32.mrf.mxu0
        %v2783 = vadd.f32 %v2670, %v2782
        %v2784 = vpop.f32.mrf.mxu0
        %v2785 = vadd.f32 %v2672, %v2784
        %v2786 = vpop.f32.mrf.mxu0
        %v2787 = vadd.f32 %v2674, %v2786
        %2788 = vmatprep.mubr.bf16.mxu0 %v2188
        %2789 = vmatmul.mubr.bf16.gmra.mxu0 %v2187
        %v2790 = vpop.f32.mrf.mxu0
        %v2791 = vadd.f32 %v2678, %v2790
        %v2792 = vpop.f32.mrf.mxu0
        %v2793 = vadd.f32 %v2680, %v2792
        %v2794 = vpop.f32.mrf.mxu0
        %v2795 = vadd.f32 %v2682, %v2794
        %v2796 = vpop.f32.mrf.mxu0
        %v2797 = vadd.f32 %v2684, %v2796
        %2798 = vdwg.mxu0
        %v2799 = vadd.f32 %v2125, %v2721
        %v2800 = vadd.f32 %v2126, %v2723
        %v2801 = vadd.f32 %v2127, %v2725
        %v2802 = vadd.f32 %v2128, %v2727
        %v2803 = vadd.f32 %v2129, %v2731
        %v2804 = vadd.f32 %v2130, %v2733
        %v2805 = vadd.f32 %v2131, %v2735
        %v2806 = vadd.f32 %v2132, %v2737
        %v2807 = vadd.f32 %v2133, %v2741
        %v2808 = vadd.f32 %v2134, %v2743
        %v2809 = vadd.f32 %v2135, %v2745
        %v2810 = vadd.f32 %v2136, %v2747
        %v2811 = vadd.f32 %v2137, %v2751
        %v2812 = vadd.f32 %v2138, %v2753
        %v2813 = vadd.f32 %v2139, %v2755
        %v2814 = vadd.f32 %v2140, %v2757
        %v2815 = vadd.f32 %v2141, %v2761
        %v2816 = vadd.f32 %v2142, %v2763
        %v2817 = vadd.f32 %v2143, %v2765
        %v2818 = vadd.f32 %v2144, %v2767
        %v2819 = vadd.f32 %v2145, %v2771
        %v2820 = vadd.f32 %v2146, %v2773
        %v2821 = vadd.f32 %v2147, %v2775
        %v2822 = vadd.f32 %v2148, %v2777
        %v2823 = vadd.f32 %v2149, %v2781
        %v2824 = vadd.f32 %v2150, %v2783
        %v2825 = vadd.f32 %v2151, %v2785
        %v2826 = vadd.f32 %v2152, %v2787
        %v2827 = vadd.f32 %v2153, %v2791
        %v2828 = vadd.f32 %v2154, %v2793
        %v2829 = vadd.f32 %v2155, %v2795
        %v2830 = vadd.f32 %v2156, %v2797
        %2831 = vst [vmem:[#allocation4] sm:$0xff] %v2799
        %2832 = vst [vmem:[#allocation4 + $0x8] sm:$0xff] %v2800
        %2833 = vst [vmem:[#allocation4 + $0x10] sm:$0xff] %v2801
        %2834 = vst [vmem:[#allocation4 + $0x18] sm:$0xff] %v2802
        %2835 = vst [vmem:[#allocation4 + $0x20] sm:$0xff] %v2803
        %2836 = vst [vmem:[#allocation4 + $0x28] sm:$0xff] %v2804
        %2837 = vst [vmem:[#allocation4 + $0x30] sm:$0xff] %v2805
        %2838 = vst [vmem:[#allocation4 + $0x38] sm:$0xff] %v2806
        %2839 = vst [vmem:[#allocation4 + $0x40] sm:$0xff] %v2807
        %2840 = vst [vmem:[#allocation4 + $0x48] sm:$0xff] %v2808
        %2841 = vst [vmem:[#allocation4 + $0x50] sm:$0xff] %v2809
        %2842 = vst [vmem:[#allocation4 + $0x58] sm:$0xff] %v2810
        %2843 = vst [vmem:[#allocation4 + $0x60] sm:$0xff] %v2811
        %2844 = vst [vmem:[#allocation4 + $0x68] sm:$0xff] %v2812
        %2845 = vst [vmem:[#allocation4 + $0x70] sm:$0xff] %v2813
        %2846 = vst [vmem:[#allocation4 + $0x78] sm:$0xff] %v2814
        %2847 = vst [vmem:[#allocation4 + $0x80] sm:$0xff] %v2815
        %2848 = vst [vmem:[#allocation4 + $0x88] sm:$0xff] %v2816
        %2849 = vst [vmem:[#allocation4 + $0x90] sm:$0xff] %v2817
        %2850 = vst [vmem:[#allocation4 + $0x98] sm:$0xff] %v2818
        %2851 = vst [vmem:[#allocation4 + $0xa0] sm:$0xff] %v2819
        %2852 = vst [vmem:[#allocation4 + $0xa8] sm:$0xff] %v2820
        %2853 = vst [vmem:[#allocation4 + $0xb0] sm:$0xff] %v2821
        %2854 = vst [vmem:[#allocation4 + $0xb8] sm:$0xff] %v2822
        %2855 = vst [vmem:[#allocation4 + $0xc0] sm:$0xff] %v2823
        %2856 = vst [vmem:[#allocation4 + $0xc8] sm:$0xff] %v2824
        %2857 = vst [vmem:[#allocation4 + $0xd0] sm:$0xff] %v2825
        %2858 = vst [vmem:[#allocation4 + $0xd8] sm:$0xff] %v2826
        %2859 = vst [vmem:[#allocation4 + $0xe0] sm:$0xff] %v2827
        %2860 = vst [vmem:[#allocation4 + $0xe8] sm:$0xff] %v2828
        %2861 = vst [vmem:[#allocation4 + $0xf0] sm:$0xff] %v2829
        %2862 = vst [vmem:[#allocation4 + $0xf8] sm:$0xff] %v2830
        %p2863 = scmp.eq.s32.totalorder %s33, 1
        // Predicated region
        $region73: #{tpu_custom_call.1} parent=47 // pred_check
          %p2864 = pneg %p2863
        $region74: #{tpu_custom_call.1} parent=47 // pred_check_branch
          %2866 = sbr.rel (%p2864) target = $region76
        $region75: #{tpu_custom_call.1} parent=47 // pred_region
          %v2867 = vld [vmem:[#allocation3] sm:$0xff]
          %v2868 = vld [vmem:[#allocation3 + $0x8] sm:$0xff]
          %v2869 = vld [vmem:[#allocation3 + $0x10] sm:$0xff]
          %v2870 = vld [vmem:[#allocation3 + $0x18] sm:$0xff]
          %v2871 = vld [vmem:[#allocation3 + $0x20] sm:$0xff]
          %v2872 = vld [vmem:[#allocation3 + $0x28] sm:$0xff]
          %v2873 = vld [vmem:[#allocation3 + $0x30] sm:$0xff]
          %v2874 = vld [vmem:[#allocation3 + $0x38] sm:$0xff]
          %v2875 = vld [vmem:[#allocation3 + $0x40] sm:$0xff]
          %v2876 = vld [vmem:[#allocation3 + $0x48] sm:$0xff]
          %v2877 = vld [vmem:[#allocation3 + $0x50] sm:$0xff]
          %v2878 = vld [vmem:[#allocation3 + $0x58] sm:$0xff]
          %v2879 = vld [vmem:[#allocation3 + $0x60] sm:$0xff]
          %v2880 = vld [vmem:[#allocation3 + $0x68] sm:$0xff]
          %v2881 = vld [vmem:[#allocation3 + $0x70] sm:$0xff]
          %v2882 = vld [vmem:[#allocation3 + $0x78] sm:$0xff]
          %v2883 = vld [vmem:[#allocation3 + $0x80] sm:$0xff]
          %v2884 = vld [vmem:[#allocation3 + $0x88] sm:$0xff]
          %v2885 = vld [vmem:[#allocation3 + $0x90] sm:$0xff]
          %v2886 = vld [vmem:[#allocation3 + $0x98] sm:$0xff]
          %v2887 = vld [vmem:[#allocation3 + $0xa0] sm:$0xff]
          %v2888 = vld [vmem:[#allocation3 + $0xa8] sm:$0xff]
          %v2889 = vld [vmem:[#allocation3 + $0xb0] sm:$0xff]
          %v2890 = vld [vmem:[#allocation3 + $0xb8] sm:$0xff]
          %v2891 = vld [vmem:[#allocation3 + $0xc0] sm:$0xff]
          %v2892 = vld [vmem:[#allocation3 + $0xc8] sm:$0xff]
          %v2893 = vld [vmem:[#allocation3 + $0xd0] sm:$0xff]
          %v2894 = vld [vmem:[#allocation3 + $0xd8] sm:$0xff]
          %v2895 = vld [vmem:[#allocation3 + $0xe0] sm:$0xff]
          %v2896 = vld [vmem:[#allocation3 + $0xe8] sm:$0xff]
          %v2897 = vld [vmem:[#allocation3 + $0xf0] sm:$0xff]
          %v2898 = vld [vmem:[#allocation3 + $0xf8] sm:$0xff]
          %v2899 = vld [vmem:[#allocation4] sm:$0xff]
          %v2900 = vld [vmem:[#allocation4 + $0x8] sm:$0xff]
          %v2901 = vld [vmem:[#allocation4 + $0x10] sm:$0xff]
          %v2902 = vld [vmem:[#allocation4 + $0x18] sm:$0xff]
          %v2903 = vld [vmem:[#allocation4 + $0x20] sm:$0xff]
          %v2904 = vld [vmem:[#allocation4 + $0x28] sm:$0xff]
          %v2905 = vld [vmem:[#allocation4 + $0x30] sm:$0xff]
          %v2906 = vld [vmem:[#allocation4 + $0x38] sm:$0xff]
          %v2907 = vld [vmem:[#allocation4 + $0x40] sm:$0xff]
          %v2908 = vld [vmem:[#allocation4 + $0x48] sm:$0xff]
          %v2909 = vld [vmem:[#allocation4 + $0x50] sm:$0xff]
          %v2910 = vld [vmem:[#allocation4 + $0x58] sm:$0xff]
          %v2911 = vld [vmem:[#allocation4 + $0x60] sm:$0xff]
          %v2912 = vld [vmem:[#allocation4 + $0x68] sm:$0xff]
          %v2913 = vld [vmem:[#allocation4 + $0x70] sm:$0xff]
          %v2914 = vld [vmem:[#allocation4 + $0x78] sm:$0xff]
          %v2915 = vld [vmem:[#allocation4 + $0x80] sm:$0xff]
          %v2916 = vld [vmem:[#allocation4 + $0x88] sm:$0xff]
          %v2917 = vld [vmem:[#allocation4 + $0x90] sm:$0xff]
          %v2918 = vld [vmem:[#allocation4 + $0x98] sm:$0xff]
          %v2919 = vld [vmem:[#allocation4 + $0xa0] sm:$0xff]
          %v2920 = vld [vmem:[#allocation4 + $0xa8] sm:$0xff]
          %v2921 = vld [vmem:[#allocation4 + $0xb0] sm:$0xff]
          %v2922 = vld [vmem:[#allocation4 + $0xb8] sm:$0xff]
          %v2923 = vld [vmem:[#allocation4 + $0xc0] sm:$0xff]
          %v2924 = vld [vmem:[#allocation4 + $0xc8] sm:$0xff]
          %v2925 = vld [vmem:[#allocation4 + $0xd0] sm:$0xff]
          %v2926 = vld [vmem:[#allocation4 + $0xd8] sm:$0xff]
          %v2927 = vld [vmem:[#allocation4 + $0xe0] sm:$0xff]
          %v2928 = vld [vmem:[#allocation4 + $0xe8] sm:$0xff]
          %v2929 = vld [vmem:[#allocation4 + $0xf0] sm:$0xff]
          %v2930 = vld [vmem:[#allocation4 + $0xf8] sm:$0xff]
          %v2931 = vmul.f32 %v2867, %v2899
          %v2932 = vmul.f32 %v2868, %v2900
          %v2933 = vmul.f32 %v2869, %v2901
          %v2934 = vmul.f32 %v2870, %v2902
          %v2935 = vmul.f32 %v2871, %v2903
          %v2936 = vmul.f32 %v2872, %v2904
          %v2937 = vmul.f32 %v2873, %v2905
          %v2938 = vmul.f32 %v2874, %v2906
          %v2939 = vmul.f32 %v2875, %v2907
          %v2940 = vmul.f32 %v2876, %v2908
          %v2941 = vmul.f32 %v2877, %v2909
          %v2942 = vmul.f32 %v2878, %v2910
          %v2943 = vmul.f32 %v2879, %v2911
          %v2944 = vmul.f32 %v2880, %v2912
          %v2945 = vmul.f32 %v2881, %v2913
          %v2946 = vmul.f32 %v2882, %v2914
          %v2947 = vmul.f32 %v2883, %v2915
          %v2948 = vmul.f32 %v2884, %v2916
          %v2949 = vmul.f32 %v2885, %v2917
          %v2950 = vmul.f32 %v2886, %v2918
          %v2951 = vmul.f32 %v2887, %v2919
          %v2952 = vmul.f32 %v2888, %v2920
          %v2953 = vmul.f32 %v2889, %v2921
          %v2954 = vmul.f32 %v2890, %v2922
          %v2955 = vmul.f32 %v2891, %v2923
          %v2956 = vmul.f32 %v2892, %v2924
          %v2957 = vmul.f32 %v2893, %v2925
          %v2958 = vmul.f32 %v2894, %v2926
          %v2959 = vmul.f32 %v2895, %v2927
          %v2960 = vmul.f32 %v2896, %v2928
          %v2961 = vmul.f32 %v2897, %v2929
          %v2962 = vmul.f32 %v2898, %v2930
          %2963 = vst [vmem:[%s440] sm:$0xff] %v2931
          %2964 = vst [vmem:[%s440 + $0x8] sm:$0xff] %v2932
          %2965 = vst [vmem:[%s440 + $0x10] sm:$0xff] %v2933
          %2966 = vst [vmem:[%s440 + $0x18] sm:$0xff] %v2934
          %2967 = vst [vmem:[%s440 + $0x20] sm:$0xff] %v2935
          %2968 = vst [vmem:[%s440 + $0x28] sm:$0xff] %v2936
          %2969 = vst [vmem:[%s440 + $0x30] sm:$0xff] %v2937
          %2970 = vst [vmem:[%s440 + $0x38] sm:$0xff] %v2938
          %2971 = vst [vmem:[%s440 + $0x40] sm:$0xff] %v2939
          %2972 = vst [vmem:[%s440 + $0x48] sm:$0xff] %v2940
          %2973 = vst [vmem:[%s440 + $0x50] sm:$0xff] %v2941
          %2974 = vst [vmem:[%s440 + $0x58] sm:$0xff] %v2942
          %2975 = vst [vmem:[%s440 + $0x60] sm:$0xff] %v2943
          %2976 = vst [vmem:[%s440 + $0x68] sm:$0xff] %v2944
          %2977 = vst [vmem:[%s440 + $0x70] sm:$0xff] %v2945
          %2978 = vst [vmem:[%s440 + $0x78] sm:$0xff] %v2946
          %2979 = vst [vmem:[%s440 + $0x80] sm:$0xff] %v2947
          %2980 = vst [vmem:[%s440 + $0x88] sm:$0xff] %v2948
          %2981 = vst [vmem:[%s440 + $0x90] sm:$0xff] %v2949
          %2982 = vst [vmem:[%s440 + $0x98] sm:$0xff] %v2950
          %2983 = vst [vmem:[%s440 + $0xa0] sm:$0xff] %v2951
          %2984 = vst [vmem:[%s440 + $0xa8] sm:$0xff] %v2952
          %2985 = vst [vmem:[%s440 + $0xb0] sm:$0xff] %v2953
          %2986 = vst [vmem:[%s440 + $0xb8] sm:$0xff] %v2954
          %2987 = vst [vmem:[%s440 + $0xc0] sm:$0xff] %v2955
          %2988 = vst [vmem:[%s440 + $0xc8] sm:$0xff] %v2956
          %2989 = vst [vmem:[%s440 + $0xd0] sm:$0xff] %v2957
          %2990 = vst [vmem:[%s440 + $0xd8] sm:$0xff] %v2958
          %2991 = vst [vmem:[%s440 + $0xe0] sm:$0xff] %v2959
          %2992 = vst [vmem:[%s440 + $0xe8] sm:$0xff] %v2960
          %2993 = vst [vmem:[%s440 + $0xf0] sm:$0xff] %v2961
          %2994 = vst [vmem:[%s440 + $0xf8] sm:$0xff] %v2962
        $region76: #{tpu_custom_call.1} parent=47 // pred_fallthru
          _
        %s2995 = sand.u32 %s215, 1
        %s2996 = scalar_lea.sflag [#allocation7], %s2995
        %s2997 = sand.u32 %s215, 1
        %s2998 = smul.addr %s2997, 256
        %s2999 = scalar_lea.vmem [#allocation14], %s2998
        // Predicated region
        $region77: #{tpu_custom_call.1} parent=47 // pred_check
          %p3000 = pneg %p225
        $region78: #{tpu_custom_call.1} parent=47 // pred_check_branch
          %3002 = sbr.rel (%p3000) target = $region80
        $region79: #{tpu_custom_call.1} parent=47 // pred_region
          %s3003 = smul.u32 16, %s32
          %s3005 = ssub.s32 4096, 4096
          %3006 = vsyncadd %s2996, %s3005
          %s3007 = smul.addr %s3003, 2
          %s3008 = smul.addr %s3007, 128
          %s3009 = scalar_lea.hbm %s7, %s3008
          %s3010 = sshll.u32 %s2999, 4
          %s3011 = int_to_ptr.vmem [resolvable:$true] %s3010
          %3016 = dma.vmem_to_hbm [thread:$0]  %s3011, 4096, %s3009, %s2996, 256, 256, 16
        $region80: #{tpu_custom_call.1} parent=47 // pred_fallthru
          _
      $region48: #{tpu_custom_call.1} parent=5 // pred_fallthru
        _
      %p3017 = scmp.le.s32.totalorder 2, %s23
      // Predicated region
      $region81: #{tpu_custom_call.1} parent=5 // pred_check
        %p3018 = pneg %p3017
      $region82: #{tpu_custom_call.1} parent=5 // pred_check_branch
        %3020 = sbr.rel (%p3018) target = $region84
      $region83: #{tpu_custom_call.1} parent=5 // pred_region
        %s3021 = ssub.s32 %s23, 2
        // Predicated region
        $region85: #{tpu_custom_call.1} parent=83 // pred_check
          %p3022 = pneg %p231
        $region86: #{tpu_custom_call.1} parent=83 // pred_check_branch
          %3024 = sbr.rel (%p3022) target = $region88
        $region87: #{tpu_custom_call.1} parent=83 // pred_region
          %s3025 = sand.u32 %s216, 1
          %s3026 = scalar_lea.sflag [#allocation7], %s3025
          %s3027 = sand.u32 %s216, 1
          %s3028 = smul.addr %s3027, 256
          %s3029 = scalar_lea.vmem [#allocation14], %s3028
          %3030 = dma.done %s3026, 4096
        $region88: #{tpu_custom_call.1} parent=83 // pred_fallthru
          _
      $region84: #{tpu_custom_call.1} parent=5 // pred_fallthru
        _
    $region6: #{tpu_custom_call.1} parent=1 // loop_footer
      %s27 = sadd.s32 1, %s23
    $region7: #{tpu_custom_call.1} parent=1 // loop_footer_branch
      %22 = sbr.rel target = $region3
    $region8: #{tpu_custom_call.1} parent=1 // loop_exit
      _
    %3031 = vsyncpa [#allocation6], 1
    %s3032 = scalar_lea.sflag [#allocation6], 1
    %3033 = vsyncpa %s3032, 1
    %3034 = vsyncpa [#allocation9], 1
    %s3035 = scalar_lea.sflag [#allocation9], 1
    %3036 = vsyncpa %s3035, 1
    %3037 = vsyncpa [#allocation12], 1
    %3038 = vsyncpa [#allocation7], 1
    %s3039 = scalar_lea.sflag [#allocation7], 1
    %3040 = vsyncpa %s3039, 1

</llo_original>
